<compile_context>
chip_gen: v7x
topology: tpu7x:2x2x1
jax: 0.10.0
libtpu: 0.0.40
codegen_flags: <defaults>
</compile_context>

<pallas_src>
import functools

import numpy as np
import jax
import jax.numpy as jnp
from jax import lax
from jax.experimental import pallas as pl
from jax.experimental.pallas import tpu as pltpu

# Plain Python floats (NOT jnp scalars): jnp scalars closed over by the kernel body
# become captured array constants, which pallas_call rejects.
_NEG_INF = -1e30
_LEAKY_SLOPE = 0.01
_LANE = 128
_SUBLANE = 8


def _round_up(x, m):
    return ((x + m - 1) // m) * m


# ----------------------------------------------------------------------------
# In-kernel helpers (traced inside the single fused kernel body)
# ----------------------------------------------------------------------------
def _attend(z, s_row, d_col, bias):
    """Masked-softmax attention aggregation for one head.

    z:[N,D] projected features, s_row:[1,N] source logit term, d_col:[N,1]
    destination logit term, bias:[N,N] additive mask (0 on edge u->v, -1e30 else).
    Returns alpha @ z : [N,D].
    """
    e = d_col + s_row                                 # [N,N] raw logits
    e = jnp.where(e > 0, e, _LEAKY_SLOPE * e)         # F.leaky_relu (slope 0.01)
    e = e + bias                                      # additive mask (no selects)
    e_max = jnp.max(e, axis=1, keepdims=True)         # [N,1] = max over real edges
    p = jnp.exp(e - e_max)                            # masked entries underflow to 0
    denom = jnp.sum(p, axis=1, keepdims=True)         # > 0 (self-loops present)
    inv = pl.reciprocal(denom, approx=True)           # EUP vrcp, frees VPU slots
    inv = inv * (2.0 - denom * inv)                   # one Newton step -> ~exact
    return jnp.dot(p * inv, z, preferred_element_type=jnp.float32)


def _gat_layer(h, w, a_src, a_dst, bias):
    """One single-head GATLayer.forward: h:[N,Din], w:[Dout,Din], a_*:[1,Dout]."""
    z = lax.dot_general(h, w, (((1,), (1,)), ((), ())),
                        preferred_element_type=jnp.float32)        # [N,Dout]
    s_row = lax.dot_general(a_src, z, (((1,), (1,)), ((), ())),
                            preferred_element_type=jnp.float32)    # [1,N] (no transpose)
    d_col = lax.dot_general(z, a_dst, (((1,), (1,)), ((), ())),
                            preferred_element_type=jnp.float32)    # [N,1]
    return _attend(z, s_row, d_col, bias)


# ----------------------------------------------------------------------------
# The single fused kernel: whole 5-layer GAT_long forward
# ----------------------------------------------------------------------------
def _gat_long_kernel(h_ref, adj_ref, wpack_ref, out_ref, *,
                     layout, num_heads, hidden_dim):
    def get(name):
        r0, nr, nc = layout[name]
        return wpack_ref[r0:r0 + nr, 0:nc]            # static slice of packed slab

    # adjacency: one int8 DMA, converted ONCE into an additive softmax bias
    bias = jnp.where(adj_ref[...].astype(jnp.float32) > 0.0, 0.0, _NEG_INF)  # [N,N]
    h = h_ref[...]                                                           # [N,Din]

    # ----- layer 1: all heads share one z matmul (stacked weights) -----
    w1 = get("w1")          # [H*hid, Din]   heads stacked on output dim
    a1s = get("a1s")        # [H, H*hid]     block-diagonal a_src
    a1d = get("a1d")        # [H, H*hid]     block-diagonal a_dst
    z_cat = lax.dot_general(h, w1, (((1,), (1,)), ((), ())),
                            preferred_element_type=jnp.float32)     # [N, H*hid]
    s_rows = lax.dot_general(a1s, z_cat, (((1,), (1,)), ((), ())),
                             preferred_element_type=jnp.float32)    # [H, N]
    d_cols = lax.dot_general(z_cat, a1d, (((1,), (1,)), ((), ())),
                             preferred_element_type=jnp.float32)    # [N, H]
    head_outs = []
    for hd in range(num_heads):                                     # static unrolled
        lo = hd * hidden_dim
        head_outs.append(_attend(z_cat[:, lo:lo + hidden_dim],
                                 s_rows[hd:hd + 1, :],
                                 d_cols[:, hd:hd + 1], bias))
    # concat stays in vregs: no scratch slab, no masked partial-lane stores
    h = jnp.maximum(jnp.concatenate(head_outs, axis=1), 0.0)        # [N, H*hid]

    # ----- layers 2..4 (with relu) and 5 (no relu) -----
    h = jnp.maximum(_gat_layer(h, get("w2"), get("a2s"), get("a2d"), bias), 0.0)
    h = jnp.maximum(_gat_layer(h, get("w3"), get("a3s"), get("a3d"), bias), 0.0)
    h = jnp.maximum(_gat_layer(h, get("w4"), get("a4s"), get("a4d"), bias), 0.0)
    # layer-5 weights were zero-padded on the host to a lane-dense (128) output;
    # the padded columns stay exactly zero through the whole layer.
    h = _gat_layer(h, get("w5"), get("a5s"), get("a5d"), bias)

    out_ref[...] = h.astype(out_ref.dtype)                          # single dense store


# ----------------------------------------------------------------------------
# Host-side packing plan (static) + one-time numpy packing
# ----------------------------------------------------------------------------
def build_plan(params):
    """Static layout for packing every weight into one f32 slab (8-row aligned)."""
    heads1 = params["layer1"]
    num_heads = len(heads1)
    hidden_dim, in_dim = heads1[0][0].shape
    dims = []
    for name in ("layer2", "layer3", "layer4", "layer5"):
        (w, _), = params[name]
        dims.append(tuple(w.shape))                  # (out_dim, in_dim)
    out_dim = dims[-1][0]
    padded_out = _round_up(out_dim, _LANE)

    entries = [("w1", num_heads * hidden_dim, in_dim),
               ("a1s", num_heads, num_heads * hidden_dim),
               ("a1d", num_heads, num_heads * hidden_dim)]
    for li, (dout, din) in zip((2, 3, 4), dims[:3]):
        entries += [(f"w{li}", dout, din),
                    (f"a{li}s", 1, dout), (f"a{li}d", 1, dout)]
    d5_out, d5_in = dims[3]
    entries += [("w5", padded_out, d5_in),
                ("a5s", 1, padded_out), ("a5d", 1, padded_out)]

    layout, row, max_cols = {}, 0, 0
    for name, r, c in entries:
        layout[name] = (row, r, c)
        row += _round_up(r, _SUBLANE)                # every segment 8-row aligned
        max_cols = max(max_cols, c)
    return dict(layout=layout,
                total_rows=_round_up(row, _SUBLANE),
                pack_cols=_round_up(max_cols, _LANE),
                num_heads=num_heads, hidden_dim=hidden_dim,
                in_dim=in_dim, out_dim=out_dim, padded_out=padded_out)


def pack_params(params, plan):
    """Pack all 15 weight tensors into ONE lane-dense f32 slab (numpy, host-side).

    Done once, outside the jit / per-call path, so the kernel sees a single DMA.
    Layer-5 rows/columns are zero-padded to 128 lanes (lane-dense final store).
    """
    layout = plan["layout"]
    num_heads, hidden_dim = plan["num_heads"], plan["hidden_dim"]
    pack = np.zeros((plan["total_rows"], plan["pack_cols"]), np.float32)

    def put(name, mat):
        r0, _, _ = layout[name]
        mat = np.asarray(mat, np.float32)
        pack[r0:r0 + mat.shape[0], :mat.shape[1]] = mat

    heads1 = params["layer1"]
    put("w1", np.concatenate([np.asarray(w) for (w, _) in heads1], axis=0))
    a1s = np.zeros((num_heads, num_heads * hidden_dim), np.float32)
    a1d = np.zeros_like(a1s)
    for i, (_, a) in enumerate(heads1):              # block-diagonal attn vectors
        a = np.asarray(a, np.float32)
        a1s[i, i * hidden_dim:(i + 1) * hidden_dim] = a[0, :hidden_dim]
        a1d[i, i * hidden_dim:(i + 1) * hidden_dim] = a[0, hidden_dim:]
    put("a1s", a1s)
    put("a1d", a1d)

    for li, name in ((2, "layer2"), (3, "layer3"), (4, "layer4"), (5, "layer5")):
        (w, a), = params[name]
        w = np.asarray(w, np.float32)
        a = np.asarray(a, np.float32)
        dout = w.shape[0]
        put(f"w{li}", w)                             # layer-5: pads to 128 rows
        put(f"a{li}s", a[:, :dout])                  # layer-5: pads to 128 cols
        put(f"a{li}d", a[:, dout:])
    return jnp.asarray(pack)


# ----------------------------------------------------------------------------
# Forward builder: one fused pallas_call, three inputs total
# ----------------------------------------------------------------------------
def make_gat_long_forward(plan):
    kernel = functools.partial(_gat_long_kernel, layout=plan["layout"],
                               num_heads=plan["num_heads"],
                               hidden_dim=plan["hidden_dim"])
    out_dim, padded_out = plan["out_dim"], plan["padded_out"]
    vmem = pl.BlockSpec(memory_space=pltpu.MemorySpace.VMEM)

    @jax.jit
    def forward(h, adj, wpack):
        n = h.shape[0]
        # Scoped-VMEM budget from the actual footprint with 2x headroom
        # (v5e's 16 MiB default is the first limit hit otherwise), clamped to a
        # range that stays safe across v5e / v6e / v7x.
        est = (h.size * 4 + adj.size + wpack.size * 4 + n * padded_out * 4
               + 6 * n * n * 4)
        vmem_limit = int(min(96 << 20, max(32 << 20, 2 * est)))
        out_padded = pl.pallas_call(
            kernel,
            out_shape=jax.ShapeDtypeStruct((n, padded_out), jnp.float32),
            in_specs=[vmem, vmem, vmem],
            out_specs=vmem,
            compiler_params=pltpu.CompilerParams(vmem_limit_bytes=vmem_limit),
        )(h, adj, wpack)
        return out_padded[:, :out_dim]               # drop lane-padding columns

    return forward


# ----------------------------------------------------------------------------
# Parameter init (xavier_normal_ with gain = calculate_gain('relu') = sqrt(2))
# ----------------------------------------------------------------------------
def _xavier_normal(key, shape, gain):
    fan_out, fan_in = shape
    std = gain * jnp.sqrt(2.0 / (fan_in + fan_out))
    return std * jax.random.normal(key, shape, dtype=jnp.float32)


def init_gat_layer(key, in_dim, out_dim):
    gain = jnp.sqrt(2.0)
    k1, k2 = jax.random.split(key)
    w = _xavier_normal(k1, (out_dim, in_dim), gain)        # fc.weight
    a = _xavier_normal(k2, (1, 2 * out_dim), gain)         # attn_fc.weight
    return w, a


def init_gat_long(key, in_dim, hidden_dim, out_dim, num_heads):
    keys = jax.random.split(key, num_heads + 4)
    params = {}
    params["layer1"] = [init_gat_layer(keys[i], in_dim, hidden_dim)
                        for i in range(num_heads)]
    params["layer2"] = [init_gat_layer(keys[num_heads + 0], hidden_dim * num_heads, 64)]
    params["layer3"] = [init_gat_layer(keys[num_heads + 1], 64, 32)]
    params["layer4"] = [init_gat_layer(keys[num_heads + 2], 32, 8)]
    params["layer5"] = [init_gat_layer(keys[num_heads + 3], 8, 2)]
    return params


def build_adjacency(n):
    """int8 adjacency, adj[v,u]=1 iff edge u -> v. Self-loops + two ring edges."""
    adj = jnp.zeros((n, n), dtype=jnp.int8)
    idx = jnp.arange(n)
    adj = adj.at[idx, idx].set(1)                     # self-loops
    adj = adj.at[(idx + 1) % n, idx].set(1)           # i -> i+1
    adj = adj.at[(idx + 2) % n, idx].set(1)           # i -> i+2
    return adj


# ----------------------------------------------------------------------------
# Pure-JAX reference (numerical sanity check)
# ----------------------------------------------------------------------------
def _reference_forward(h, params, adj):
    hp = lax.Precision.HIGHEST
    mask = adj != 0

    def gat_head(x, w, a):
        dout = w.shape[0]
        z = jnp.dot(x, w.T, precision=hp)
        s = jnp.dot(z, a[0, :dout], precision=hp)       # [N]
        d = jnp.dot(z, a[0, dout:], precision=hp)       # [N]
        e = d[:, None] + s[None, :]
        e = jnp.where(e > 0, e, 0.01 * e)
        em = jnp.where(mask, e, -1e30)
        em = em - jnp.max(em, axis=1, keepdims=True)
        p = jnp.where(mask, jnp.exp(em), 0.0)
        alpha = p / jnp.sum(p, axis=1, keepdims=True)
        return jnp.dot(alpha, z, precision=hp)

    x = jnp.concatenate([gat_head(h, w, a) for (w, a) in params["layer1"]], axis=1)
    x = jnp.maximum(x, 0.0)
    for name in ("layer2", "layer3", "layer4"):
        (w, a), = params[name]
        x = jnp.maximum(gat_head(x, w, a), 0.0)
    (w, a), = params["layer5"]
    return gat_head(x, w, a)


if __name__ == "__main__":
    N = 16            # number of graph nodes
    IN_DIM = 16
    HIDDEN_DIM = 32
    OUT_DIM = 2       # fixed by GAT_long's final layer
    NUM_HEADS = 2

    key = jax.random.PRNGKey(0)
    k_feat, k_param = jax.random.split(key)

    h0 = jax.random.normal(k_feat, (N, IN_DIM), dtype=jnp.float32)
    adj = build_adjacency(N)                              # int8 [N,N]
    params = init_gat_long(k_param, IN_DIM, HIDDEN_DIM, OUT_DIM, NUM_HEADS)

    # Host-side packing done ONCE, outside the per-call jit path.
    plan = build_plan(params)
    wpack = pack_params(params, plan)
    forward = make_gat_long_forward(plan)

    out = jax.block_until_ready(forward(h0, adj, wpack))
    assert out.shape == (N, OUT_DIM), out.shape
    assert bool(jnp.all(jnp.isfinite(out)))

    ref = jax.block_until_ready(_reference_forward(h0, params, adj))
    max_err = float(jnp.max(jnp.abs(out - ref)))
    assert max_err < 1e-2, f"mismatch vs reference: {max_err}"

    # TODO(synk): for very large graphs, row-tile the attention (grid over
    # destination-row tiles, parallel dimension_semantics) instead of keeping
    # the full N x N softmax resident in VMEM.
    print("KERNEL_OK")
</pallas_src>

<mosaic_0001>
module attributes {stable_mosaic.version = 11 : i64} {
  func.func @_gat_long_kernel(%arg0: memref<16x16xf32, #tpu.memory_space<vmem>>, %arg1: memref<16x16xi8, #tpu.memory_space<vmem>>, %arg2: memref<376x128xf32, #tpu.memory_space<vmem>>, %arg3: memref<16x128xf32, #tpu.memory_space<vmem>>) attributes {dimension_semantics = [], scalar_prefetch = 0 : i64, scratch_operands = 0 : i64, tpu.core_type = #tpu.core_type<tc>} {
    %c0 = arith.constant 0 : index
    %c0_0 = arith.constant 0 : index
    %0 = vector.load %arg1[%c0, %c0_0] : memref<16x16xi8, #tpu.memory_space<vmem>>, vector<16x16xi8>
    %1 = arith.sitofp %0 : vector<16x16xi8> to vector<16x16xf32>
    %cst = arith.constant 0.000000e+00 : f32
    %2 = vector.broadcast %cst : f32 to vector<16x16xf32>
    %3 = arith.cmpf ogt, %1, %2 : vector<16x16xf32>
    %cst_1 = arith.constant 0.000000e+00 : f32
    %cst_2 = arith.constant -1.000000e+30 : f32
    %4 = vector.broadcast %cst_1 : f32 to vector<16x16xf32>
    %5 = vector.broadcast %cst_2 : f32 to vector<16x16xf32>
    %6 = arith.select %3, %4, %5 : vector<16x16xi1>, vector<16x16xf32>
    %c0_3 = arith.constant 0 : index
    %c0_4 = arith.constant 0 : index
    %7 = vector.load %arg0[%c0_3, %c0_4] : memref<16x16xf32, #tpu.memory_space<vmem>>, vector<16x16xf32>
    %c0_5 = arith.constant 0 : index
    %c0_6 = arith.constant 0 : index
    %8 = vector.load %arg2[%c0_5, %c0_6] : memref<376x128xf32, #tpu.memory_space<vmem>>, vector<64x16xf32>
    %c64 = arith.constant 64 : index
    %c0_7 = arith.constant 0 : index
    %9 = vector.load %arg2[%c64, %c0_7] : memref<376x128xf32, #tpu.memory_space<vmem>>, vector<2x64xf32>
    %c72 = arith.constant 72 : index
    %c0_8 = arith.constant 0 : index
    %10 = vector.load %arg2[%c72, %c0_8] : memref<376x128xf32, #tpu.memory_space<vmem>>, vector<2x64xf32>
    %cst_9 = arith.constant dense<0.000000e+00> : vector<16x64xf32>
    %11 = tpu.matmul %7, %8, %cst_9 {dimension_numbers = #tpu.dot_dimension_numbers<[1], [1], [0], [0], [0, 0, 1, 0], [], []>} : vector<16x16xf32>, vector<64x16xf32>, vector<16x64xf32> -> vector<16x64xf32>
    %cst_10 = arith.constant dense<0.000000e+00> : vector<2x16xf32>
    %12 = tpu.matmul %9, %11, %cst_10 {dimension_numbers = #tpu.dot_dimension_numbers<[1], [1], [0], [0], [0, 0, 1, 0], [], []>} : vector<2x64xf32>, vector<16x64xf32>, vector<2x16xf32> -> vector<2x16xf32>
    %cst_11 = arith.constant dense<0.000000e+00> : vector<16x2xf32>
    %13 = tpu.matmul %11, %10, %cst_11 {dimension_numbers = #tpu.dot_dimension_numbers<[1], [1], [0], [0], [0, 0, 1, 0], [], []>} : vector<16x64xf32>, vector<2x64xf32>, vector<16x2xf32> -> vector<16x2xf32>
    %14 = vector.extract_strided_slice %11 {offsets = [0, 0], sizes = [16, 32], strides = [1, 1]} : vector<16x64xf32> to vector<16x32xf32>
    %15 = vector.extract_strided_slice %12 {offsets = [0, 0], sizes = [1, 16], strides = [1, 1]} : vector<2x16xf32> to vector<1x16xf32>
    %16 = vector.extract_strided_slice %13 {offsets = [0, 0], sizes = [16, 1], strides = [1, 1]} : vector<16x2xf32> to vector<16x1xf32>
    %17 = vector.broadcast %16 : vector<16x1xf32> to vector<16x16xf32>
    %18 = vector.broadcast %15 : vector<1x16xf32> to vector<16x16xf32>
    %19 = arith.addf %17, %18 : vector<16x16xf32>
    %cst_12 = arith.constant 0.000000e+00 : f32
    %20 = vector.broadcast %cst_12 : f32 to vector<16x16xf32>
    %21 = arith.cmpf ogt, %19, %20 : vector<16x16xf32>
    %cst_13 = arith.constant 0.00999999977 : f32
    %22 = vector.broadcast %cst_13 : f32 to vector<16x16xf32>
    %23 = arith.mulf %22, %19 : vector<16x16xf32>
    %24 = arith.select %21, %19, %23 : vector<16x16xi1>, vector<16x16xf32>
    %25 = arith.addf %24, %6 : vector<16x16xf32>
    %cst_14 = arith.constant dense<0xFF800000> : vector<16xf32>
    %26 = vector.multi_reduction <maximumf>, %25, %cst_14 [1] : vector<16x16xf32> to vector<16xf32>
    %27 = vector.shape_cast %26 : vector<16xf32> to vector<16x1xf32>
    %28 = vector.broadcast %27 : vector<16x1xf32> to vector<16x16xf32>
    %29 = arith.subf %25, %28 : vector<16x16xf32>
    %30 = math.exp %29 : vector<16x16xf32>
    %cst_15 = arith.constant dense<0.000000e+00> : vector<16xf32>
    %31 = vector.multi_reduction <add>, %30, %cst_15 [1] : vector<16x16xf32> to vector<16xf32>
    %32 = vector.shape_cast %31 : vector<16xf32> to vector<16x1xf32>
    %33 = tpu.reciprocal %32 {approx = true} : vector<16x1xf32> -> vector<16x1xf32>
    %34 = arith.mulf %32, %33 : vector<16x1xf32>
    %cst_16 = arith.constant 2.000000e+00 : f32
    %35 = vector.broadcast %cst_16 : f32 to vector<16x1xf32>
    %36 = arith.subf %35, %34 : vector<16x1xf32>
    %37 = arith.mulf %33, %36 : vector<16x1xf32>
    %38 = vector.broadcast %37 : vector<16x1xf32> to vector<16x16xf32>
    %39 = arith.mulf %30, %38 : vector<16x16xf32>
    %cst_17 = arith.constant dense<0.000000e+00> : vector<16x32xf32>
    %40 = tpu.matmul %39, %14, %cst_17 {dimension_numbers = #tpu.dot_dimension_numbers<[1], [0], [0], [1], [0, 0, 1, 1], [], []>} : vector<16x16xf32>, vector<16x32xf32>, vector<16x32xf32> -> vector<16x32xf32>
    %41 = vector.extract_strided_slice %11 {offsets = [0, 32], sizes = [16, 32], strides = [1, 1]} : vector<16x64xf32> to vector<16x32xf32>
    %42 = vector.extract_strided_slice %12 {offsets = [1, 0], sizes = [1, 16], strides = [1, 1]} : vector<2x16xf32> to vector<1x16xf32>
    %43 = vector.extract_strided_slice %13 {offsets = [0, 1], sizes = [16, 1], strides = [1, 1]} : vector<16x2xf32> to vector<16x1xf32>
    %44 = vector.broadcast %43 : vector<16x1xf32> to vector<16x16xf32>
    %45 = vector.broadcast %42 : vector<1x16xf32> to vector<16x16xf32>
    %46 = arith.addf %44, %45 : vector<16x16xf32>
    %cst_18 = arith.constant 0.000000e+00 : f32
    %47 = vector.broadcast %cst_18 : f32 to vector<16x16xf32>
    %48 = arith.cmpf ogt, %46, %47 : vector<16x16xf32>
    %cst_19 = arith.constant 0.00999999977 : f32
    %49 = vector.broadcast %cst_19 : f32 to vector<16x16xf32>
    %50 = arith.mulf %49, %46 : vector<16x16xf32>
    %51 = arith.select %48, %46, %50 : vector<16x16xi1>, vector<16x16xf32>
    %52 = arith.addf %51, %6 : vector<16x16xf32>
    %cst_20 = arith.constant dense<0xFF800000> : vector<16xf32>
    %53 = vector.multi_reduction <maximumf>, %52, %cst_20 [1] : vector<16x16xf32> to vector<16xf32>
    %54 = vector.shape_cast %53 : vector<16xf32> to vector<16x1xf32>
    %55 = vector.broadcast %54 : vector<16x1xf32> to vector<16x16xf32>
    %56 = arith.subf %52, %55 : vector<16x16xf32>
    %57 = math.exp %56 : vector<16x16xf32>
    %cst_21 = arith.constant dense<0.000000e+00> : vector<16xf32>
    %58 = vector.multi_reduction <add>, %57, %cst_21 [1] : vector<16x16xf32> to vector<16xf32>
    %59 = vector.shape_cast %58 : vector<16xf32> to vector<16x1xf32>
    %60 = tpu.reciprocal %59 {approx = true} : vector<16x1xf32> -> vector<16x1xf32>
    %61 = arith.mulf %59, %60 : vector<16x1xf32>
    %cst_22 = arith.constant 2.000000e+00 : f32
    %62 = vector.broadcast %cst_22 : f32 to vector<16x1xf32>
    %63 = arith.subf %62, %61 : vector<16x1xf32>
    %64 = arith.mulf %60, %63 : vector<16x1xf32>
    %65 = vector.broadcast %64 : vector<16x1xf32> to vector<16x16xf32>
    %66 = arith.mulf %57, %65 : vector<16x16xf32>
    %cst_23 = arith.constant dense<0.000000e+00> : vector<16x32xf32>
    %67 = tpu.matmul %66, %41, %cst_23 {dimension_numbers = #tpu.dot_dimension_numbers<[1], [0], [0], [1], [0, 0, 1, 1], [], []>} : vector<16x16xf32>, vector<16x32xf32>, vector<16x32xf32> -> vector<16x32xf32>
    %68 = tpu.concatenate %40, %67 in 1 : vector<16x32xf32>, vector<16x32xf32> -> vector<16x64xf32>
    %cst_24 = arith.constant 0.000000e+00 : f32
    %69 = vector.broadcast %cst_24 : f32 to vector<16x64xf32>
    %70 = arith.maximumf %68, %69 : vector<16x64xf32>
    %c80 = arith.constant 80 : index
    %c0_25 = arith.constant 0 : index
    %71 = vector.load %arg2[%c80, %c0_25] : memref<376x128xf32, #tpu.memory_space<vmem>>, vector<64x64xf32>
    %c144 = arith.constant 144 : index
    %c0_26 = arith.constant 0 : index
    %72 = vector.load %arg2[%c144, %c0_26] : memref<376x128xf32, #tpu.memory_space<vmem>>, vector<1x64xf32>
    %c152 = arith.constant 152 : index
    %c0_27 = arith.constant 0 : index
    %73 = vector.load %arg2[%c152, %c0_27] : memref<376x128xf32, #tpu.memory_space<vmem>>, vector<1x64xf32>
    %cst_28 = arith.constant dense<0.000000e+00> : vector<16x64xf32>
    %74 = tpu.matmul %70, %71, %cst_28 {dimension_numbers = #tpu.dot_dimension_numbers<[1], [1], [0], [0], [0, 0, 1, 0], [], []>} : vector<16x64xf32>, vector<64x64xf32>, vector<16x64xf32> -> vector<16x64xf32>
    %cst_29 = arith.constant dense<0.000000e+00> : vector<1x16xf32>
    %75 = tpu.matmul %72, %74, %cst_29 {dimension_numbers = #tpu.dot_dimension_numbers<[1], [1], [0], [0], [0, 0, 1, 0], [], []>} : vector<1x64xf32>, vector<16x64xf32>, vector<1x16xf32> -> vector<1x16xf32>
    %cst_30 = arith.constant dense<0.000000e+00> : vector<16x1xf32>
    %76 = tpu.matmul %74, %73, %cst_30 {dimension_numbers = #tpu.dot_dimension_numbers<[1], [1], [0], [0], [0, 0, 1, 0], [], []>} : vector<16x64xf32>, vector<1x64xf32>, vector<16x1xf32> -> vector<16x1xf32>
    %77 = vector.broadcast %76 : vector<16x1xf32> to vector<16x16xf32>
    %78 = vector.broadcast %75 : vector<1x16xf32> to vector<16x16xf32>
    %79 = arith.addf %77, %78 : vector<16x16xf32>
    %cst_31 = arith.constant 0.000000e+00 : f32
    %80 = vector.broadcast %cst_31 : f32 to vector<16x16xf32>
    %81 = arith.cmpf ogt, %79, %80 : vector<16x16xf32>
    %cst_32 = arith.constant 0.00999999977 : f32
    %82 = vector.broadcast %cst_32 : f32 to vector<16x16xf32>
    %83 = arith.mulf %82, %79 : vector<16x16xf32>
    %84 = arith.select %81, %79, %83 : vector<16x16xi1>, vector<16x16xf32>
    %85 = arith.addf %84, %6 : vector<16x16xf32>
    %cst_33 = arith.constant dense<0xFF800000> : vector<16xf32>
    %86 = vector.multi_reduction <maximumf>, %85, %cst_33 [1] : vector<16x16xf32> to vector<16xf32>
    %87 = vector.shape_cast %86 : vector<16xf32> to vector<16x1xf32>
    %88 = vector.broadcast %87 : vector<16x1xf32> to vector<16x16xf32>
    %89 = arith.subf %85, %88 : vector<16x16xf32>
    %90 = math.exp %89 : vector<16x16xf32>
    %cst_34 = arith.constant dense<0.000000e+00> : vector<16xf32>
    %91 = vector.multi_reduction <add>, %90, %cst_34 [1] : vector<16x16xf32> to vector<16xf32>
    %92 = vector.shape_cast %91 : vector<16xf32> to vector<16x1xf32>
    %93 = tpu.reciprocal %92 {approx = true} : vector<16x1xf32> -> vector<16x1xf32>
    %94 = arith.mulf %92, %93 : vector<16x1xf32>
    %cst_35 = arith.constant 2.000000e+00 : f32
    %95 = vector.broadcast %cst_35 : f32 to vector<16x1xf32>
    %96 = arith.subf %95, %94 : vector<16x1xf32>
    %97 = arith.mulf %93, %96 : vector<16x1xf32>
    %98 = vector.broadcast %97 : vector<16x1xf32> to vector<16x16xf32>
    %99 = arith.mulf %90, %98 : vector<16x16xf32>
    %cst_36 = arith.constant dense<0.000000e+00> : vector<16x64xf32>
    %100 = tpu.matmul %99, %74, %cst_36 {dimension_numbers = #tpu.dot_dimension_numbers<[1], [0], [0], [1], [0, 0, 1, 1], [], []>} : vector<16x16xf32>, vector<16x64xf32>, vector<16x64xf32> -> vector<16x64xf32>
    %cst_37 = arith.constant 0.000000e+00 : f32
    %101 = vector.broadcast %cst_37 : f32 to vector<16x64xf32>
    %102 = arith.maximumf %100, %101 : vector<16x64xf32>
    %c160 = arith.constant 160 : index
    %c0_38 = arith.constant 0 : index
    %103 = vector.load %arg2[%c160, %c0_38] : memref<376x128xf32, #tpu.memory_space<vmem>>, vector<32x64xf32>
    %c192 = arith.constant 192 : index
    %c0_39 = arith.constant 0 : index
    %104 = vector.load %arg2[%c192, %c0_39] : memref<376x128xf32, #tpu.memory_space<vmem>>, vector<1x32xf32>
    %c200 = arith.constant 200 : index
    %c0_40 = arith.constant 0 : index
    %105 = vector.load %arg2[%c200, %c0_40] : memref<376x128xf32, #tpu.memory_space<vmem>>, vector<1x32xf32>
    %cst_41 = arith.constant dense<0.000000e+00> : vector<16x32xf32>
    %106 = tpu.matmul %102, %103, %cst_41 {dimension_numbers = #tpu.dot_dimension_numbers<[1], [1], [0], [0], [0, 0, 1, 0], [], []>} : vector<16x64xf32>, vector<32x64xf32>, vector<16x32xf32> -> vector<16x32xf32>
    %cst_42 = arith.constant dense<0.000000e+00> : vector<1x16xf32>
    %107 = tpu.matmul %104, %106, %cst_42 {dimension_numbers = #tpu.dot_dimension_numbers<[1], [1], [0], [0], [0, 0, 1, 0], [], []>} : vector<1x32xf32>, vector<16x32xf32>, vector<1x16xf32> -> vector<1x16xf32>
    %cst_43 = arith.constant dense<0.000000e+00> : vector<16x1xf32>
    %108 = tpu.matmul %106, %105, %cst_43 {dimension_numbers = #tpu.dot_dimension_numbers<[1], [1], [0], [0], [0, 0, 1, 0], [], []>} : vector<16x32xf32>, vector<1x32xf32>, vector<16x1xf32> -> vector<16x1xf32>
    %109 = vector.broadcast %108 : vector<16x1xf32> to vector<16x16xf32>
    %110 = vector.broadcast %107 : vector<1x16xf32> to vector<16x16xf32>
    %111 = arith.addf %109, %110 : vector<16x16xf32>
    %cst_44 = arith.constant 0.000000e+00 : f32
    %112 = vector.broadcast %cst_44 : f32 to vector<16x16xf32>
    %113 = arith.cmpf ogt, %111, %112 : vector<16x16xf32>
    %cst_45 = arith.constant 0.00999999977 : f32
    %114 = vector.broadcast %cst_45 : f32 to vector<16x16xf32>
    %115 = arith.mulf %114, %111 : vector<16x16xf32>
    %116 = arith.select %113, %111, %115 : vector<16x16xi1>, vector<16x16xf32>
    %117 = arith.addf %116, %6 : vector<16x16xf32>
    %cst_46 = arith.constant dense<0xFF800000> : vector<16xf32>
    %118 = vector.multi_reduction <maximumf>, %117, %cst_46 [1] : vector<16x16xf32> to vector<16xf32>
    %119 = vector.shape_cast %118 : vector<16xf32> to vector<16x1xf32>
    %120 = vector.broadcast %119 : vector<16x1xf32> to vector<16x16xf32>
    %121 = arith.subf %117, %120 : vector<16x16xf32>
    %122 = math.exp %121 : vector<16x16xf32>
    %cst_47 = arith.constant dense<0.000000e+00> : vector<16xf32>
    %123 = vector.multi_reduction <add>, %122, %cst_47 [1] : vector<16x16xf32> to vector<16xf32>
    %124 = vector.shape_cast %123 : vector<16xf32> to vector<16x1xf32>
    %125 = tpu.reciprocal %124 {approx = true} : vector<16x1xf32> -> vector<16x1xf32>
    %126 = arith.mulf %124, %125 : vector<16x1xf32>
    %cst_48 = arith.constant 2.000000e+00 : f32
    %127 = vector.broadcast %cst_48 : f32 to vector<16x1xf32>
    %128 = arith.subf %127, %126 : vector<16x1xf32>
    %129 = arith.mulf %125, %128 : vector<16x1xf32>
    %130 = vector.broadcast %129 : vector<16x1xf32> to vector<16x16xf32>
    %131 = arith.mulf %122, %130 : vector<16x16xf32>
    %cst_49 = arith.constant dense<0.000000e+00> : vector<16x32xf32>
    %132 = tpu.matmul %131, %106, %cst_49 {dimension_numbers = #tpu.dot_dimension_numbers<[1], [0], [0], [1], [0, 0, 1, 1], [], []>} : vector<16x16xf32>, vector<16x32xf32>, vector<16x32xf32> -> vector<16x32xf32>
    %cst_50 = arith.constant 0.000000e+00 : f32
    %133 = vector.broadcast %cst_50 : f32 to vector<16x32xf32>
    %134 = arith.maximumf %132, %133 : vector<16x32xf32>
    %c208 = arith.constant 208 : index
    %c0_51 = arith.constant 0 : index
    %135 = vector.load %arg2[%c208, %c0_51] : memref<376x128xf32, #tpu.memory_space<vmem>>, vector<8x32xf32>
    %c216 = arith.constant 216 : index
    %c0_52 = arith.constant 0 : index
    %136 = vector.load %arg2[%c216, %c0_52] : memref<376x128xf32, #tpu.memory_space<vmem>>, vector<1x8xf32>
    %c224 = arith.constant 224 : index
    %c0_53 = arith.constant 0 : index
    %137 = vector.load %arg2[%c224, %c0_53] : memref<376x128xf32, #tpu.memory_space<vmem>>, vector<1x8xf32>
    %cst_54 = arith.constant dense<0.000000e+00> : vector<16x8xf32>
    %138 = tpu.matmul %134, %135, %cst_54 {dimension_numbers = #tpu.dot_dimension_numbers<[1], [1], [0], [0], [0, 0, 1, 0], [], []>} : vector<16x32xf32>, vector<8x32xf32>, vector<16x8xf32> -> vector<16x8xf32>
    %cst_55 = arith.constant dense<0.000000e+00> : vector<1x16xf32>
    %139 = tpu.matmul %136, %138, %cst_55 {dimension_numbers = #tpu.dot_dimension_numbers<[1], [1], [0], [0], [0, 0, 1, 0], [], []>} : vector<1x8xf32>, vector<16x8xf32>, vector<1x16xf32> -> vector<1x16xf32>
    %cst_56 = arith.constant dense<0.000000e+00> : vector<16x1xf32>
    %140 = tpu.matmul %138, %137, %cst_56 {dimension_numbers = #tpu.dot_dimension_numbers<[1], [1], [0], [0], [0, 0, 1, 0], [], []>} : vector<16x8xf32>, vector<1x8xf32>, vector<16x1xf32> -> vector<16x1xf32>
    %141 = vector.broadcast %140 : vector<16x1xf32> to vector<16x16xf32>
    %142 = vector.broadcast %139 : vector<1x16xf32> to vector<16x16xf32>
    %143 = arith.addf %141, %142 : vector<16x16xf32>
    %cst_57 = arith.constant 0.000000e+00 : f32
    %144 = vector.broadcast %cst_57 : f32 to vector<16x16xf32>
    %145 = arith.cmpf ogt, %143, %144 : vector<16x16xf32>
    %cst_58 = arith.constant 0.00999999977 : f32
    %146 = vector.broadcast %cst_58 : f32 to vector<16x16xf32>
    %147 = arith.mulf %146, %143 : vector<16x16xf32>
    %148 = arith.select %145, %143, %147 : vector<16x16xi1>, vector<16x16xf32>
    %149 = arith.addf %148, %6 : vector<16x16xf32>
    %cst_59 = arith.constant dense<0xFF800000> : vector<16xf32>
    %150 = vector.multi_reduction <maximumf>, %149, %cst_59 [1] : vector<16x16xf32> to vector<16xf32>
    %151 = vector.shape_cast %150 : vector<16xf32> to vector<16x1xf32>
    %152 = vector.broadcast %151 : vector<16x1xf32> to vector<16x16xf32>
    %153 = arith.subf %149, %152 : vector<16x16xf32>
    %154 = math.exp %153 : vector<16x16xf32>
    %cst_60 = arith.constant dense<0.000000e+00> : vector<16xf32>
    %155 = vector.multi_reduction <add>, %154, %cst_60 [1] : vector<16x16xf32> to vector<16xf32>
    %156 = vector.shape_cast %155 : vector<16xf32> to vector<16x1xf32>
    %157 = tpu.reciprocal %156 {approx = true} : vector<16x1xf32> -> vector<16x1xf32>
    %158 = arith.mulf %156, %157 : vector<16x1xf32>
    %cst_61 = arith.constant 2.000000e+00 : f32
    %159 = vector.broadcast %cst_61 : f32 to vector<16x1xf32>
    %160 = arith.subf %159, %158 : vector<16x1xf32>
    %161 = arith.mulf %157, %160 : vector<16x1xf32>
    %162 = vector.broadcast %161 : vector<16x1xf32> to vector<16x16xf32>
    %163 = arith.mulf %154, %162 : vector<16x16xf32>
    %cst_62 = arith.constant dense<0.000000e+00> : vector<16x8xf32>
    %164 = tpu.matmul %163, %138, %cst_62 {dimension_numbers = #tpu.dot_dimension_numbers<[1], [0], [0], [1], [0, 0, 1, 1], [], []>} : vector<16x16xf32>, vector<16x8xf32>, vector<16x8xf32> -> vector<16x8xf32>
    %cst_63 = arith.constant 0.000000e+00 : f32
    %165 = vector.broadcast %cst_63 : f32 to vector<16x8xf32>
    %166 = arith.maximumf %164, %165 : vector<16x8xf32>
    %c232 = arith.constant 232 : index
    %c0_64 = arith.constant 0 : index
    %167 = vector.load %arg2[%c232, %c0_64] : memref<376x128xf32, #tpu.memory_space<vmem>>, vector<128x8xf32>
    %c360 = arith.constant 360 : index
    %c0_65 = arith.constant 0 : index
    %168 = vector.load %arg2[%c360, %c0_65] : memref<376x128xf32, #tpu.memory_space<vmem>>, vector<1x128xf32>
    %c368 = arith.constant 368 : index
    %c0_66 = arith.constant 0 : index
    %169 = vector.load %arg2[%c368, %c0_66] : memref<376x128xf32, #tpu.memory_space<vmem>>, vector<1x128xf32>
    %cst_67 = arith.constant dense<0.000000e+00> : vector<16x128xf32>
    %170 = tpu.matmul %166, %167, %cst_67 {dimension_numbers = #tpu.dot_dimension_numbers<[1], [1], [0], [0], [0, 0, 1, 0], [], []>} : vector<16x8xf32>, vector<128x8xf32>, vector<16x128xf32> -> vector<16x128xf32>
    %cst_68 = arith.constant dense<0.000000e+00> : vector<1x16xf32>
    %171 = tpu.matmul %168, %170, %cst_68 {dimension_numbers = #tpu.dot_dimension_numbers<[1], [1], [0], [0], [0, 0, 1, 0], [], []>} : vector<1x128xf32>, vector<16x128xf32>, vector<1x16xf32> -> vector<1x16xf32>
    %cst_69 = arith.constant dense<0.000000e+00> : vector<16x1xf32>
    %172 = tpu.matmul %170, %169, %cst_69 {dimension_numbers = #tpu.dot_dimension_numbers<[1], [1], [0], [0], [0, 0, 1, 0], [], []>} : vector<16x128xf32>, vector<1x128xf32>, vector<16x1xf32> -> vector<16x1xf32>
    %173 = vector.broadcast %172 : vector<16x1xf32> to vector<16x16xf32>
    %174 = vector.broadcast %171 : vector<1x16xf32> to vector<16x16xf32>
    %175 = arith.addf %173, %174 : vector<16x16xf32>
    %cst_70 = arith.constant 0.000000e+00 : f32
    %176 = vector.broadcast %cst_70 : f32 to vector<16x16xf32>
    %177 = arith.cmpf ogt, %175, %176 : vector<16x16xf32>
    %cst_71 = arith.constant 0.00999999977 : f32
    %178 = vector.broadcast %cst_71 : f32 to vector<16x16xf32>
    %179 = arith.mulf %178, %175 : vector<16x16xf32>
    %180 = arith.select %177, %175, %179 : vector<16x16xi1>, vector<16x16xf32>
    %181 = arith.addf %180, %6 : vector<16x16xf32>
    %cst_72 = arith.constant dense<0xFF800000> : vector<16xf32>
    %182 = vector.multi_reduction <maximumf>, %181, %cst_72 [1] : vector<16x16xf32> to vector<16xf32>
    %183 = vector.shape_cast %182 : vector<16xf32> to vector<16x1xf32>
    %184 = vector.broadcast %183 : vector<16x1xf32> to vector<16x16xf32>
    %185 = arith.subf %181, %184 : vector<16x16xf32>
    %186 = math.exp %185 : vector<16x16xf32>
    %cst_73 = arith.constant dense<0.000000e+00> : vector<16xf32>
    %187 = vector.multi_reduction <add>, %186, %cst_73 [1] : vector<16x16xf32> to vector<16xf32>
    %188 = vector.shape_cast %187 : vector<16xf32> to vector<16x1xf32>
    %189 = tpu.reciprocal %188 {approx = true} : vector<16x1xf32> -> vector<16x1xf32>
    %190 = arith.mulf %188, %189 : vector<16x1xf32>
    %cst_74 = arith.constant 2.000000e+00 : f32
    %191 = vector.broadcast %cst_74 : f32 to vector<16x1xf32>
    %192 = arith.subf %191, %190 : vector<16x1xf32>
    %193 = arith.mulf %189, %192 : vector<16x1xf32>
    %194 = vector.broadcast %193 : vector<16x1xf32> to vector<16x16xf32>
    %195 = arith.mulf %186, %194 : vector<16x16xf32>
    %cst_75 = arith.constant dense<0.000000e+00> : vector<16x128xf32>
    %196 = tpu.matmul %195, %170, %cst_75 {dimension_numbers = #tpu.dot_dimension_numbers<[1], [0], [0], [1], [0, 0, 1, 1], [], []>} : vector<16x16xf32>, vector<16x128xf32>, vector<16x128xf32> -> vector<16x128xf32>
    %c0_76 = arith.constant 0 : index
    %c0_77 = arith.constant 0 : index
    %197 = vector.load %arg3[%c0_76, %c0_77] : memref<16x128xf32, #tpu.memory_space<vmem>>, vector<16x128xf32>
    tpu.vector_store %arg3[%c0_76, %c0_77], %196 {strides = array<i32>} : memref<16x128xf32, #tpu.memory_space<vmem>>, vector<16x128xf32>,
    return
  }
}

</mosaic_0001>

<llo_original>
// kernel: forward.1
$region0: #{forward.1}
  #allocation0 [shape = 'u32[]', space=smem, size = 0x4, offset = 0x4, fixed_abs, tag = 'smem constant byte address 0x4 - core index']
  #allocation1 [shape = 'u32[144,128]{1,0:T(1,128)}', space=vmem, size = 0x12000, scoped, tag = 'internal scratch']
  %s0 = inlined_call_operand.hbm [shape: f32[16,16], index: 0, kind: input, shape index: {}]
  %s1 = inlined_call_operand.hbm [shape: s8[16,16], index: 1, kind: input, shape index: {}]
  %s2 = inlined_call_operand.hbm [shape: f32[376,128], index: 2, kind: input, shape index: {}]
  %s3 = inlined_call_operand.vmem [shape: f32[16,128], index: 3, kind: output, shape index: {}]
  %s4 = sld [smem:[#allocation0]]
  $region34: #{forward.1} parent=0
    _
  %s6 = ssub.s32 1, %s4
  %s7 = scalar_select 0, %s6, %s4
  $region1: #{forward.1} parent=0
    #allocation2 [shape = 'u8[8192]{0}', space=vmem, size = 0x2000, scoped, tag = 'input window, operand 0, single buffered']
    #allocation3 [shape = 's32[1]{0}', space=sflag, size = 0x4, scoped, tag = 'scoped memory for forward.1']
    #allocation4 [shape = 'u8[2048]{0}', space=vmem, size = 0x800, scoped, tag = 'input window, operand 1, single buffered']
    #allocation5 [shape = 's32[1]{0}', space=sflag, size = 0x4, scoped, tag = 'scoped memory for forward.1']
    #allocation6 [shape = 'u8[192512]{0}', space=vmem, size = 0x2f000, scoped, tag = 'input window, operand 2, single buffered']
    %8 = vsyncpa [#allocation3], 0
    %9 = vsyncpa [#allocation5], 0
    // Predicated region
    $region2: #{forward.1} parent=1 // pred_check
      _
    $region3: #{forward.1} parent=1 // pred_check_branch
      %11 = sbr.rel (0) target = $region5
    $region4: #{forward.1} parent=1 // pred_region
      %s13 = ssub.s32 256, 256
      %14 = vsyncadd [#allocation3], %s13
      %s15 = sshll.u32 [#allocation2], 4
      %s16 = int_to_ptr.vmem [resolvable:$true] %s15
      %21 = dma.hbm_to_vmem [thread:$0]  %s0, 256, %s16, [#allocation3], 128, 128, 8
    $region5: #{forward.1} parent=1 // pred_fallthru
      _
    // Predicated region
    $region6: #{forward.1} parent=1 // pred_check
      _
    $region7: #{forward.1} parent=1 // pred_check_branch
      %23 = sbr.rel (0) target = $region9
    $region8: #{forward.1} parent=1 // pred_region
      %s25 = ssub.s32 64, 64
      %26 = vsyncadd [#allocation5], %s25
      %s27 = sshll.u32 [#allocation4], 4
      %s28 = int_to_ptr.vmem [resolvable:$true] %s27
      %33 = dma.hbm_to_vmem [thread:$0]  %s1, 64, %s28, [#allocation5], 32, 32, 2
    $region9: #{forward.1} parent=1 // pred_fallthru
      _
    // Predicated region
    $region10: #{forward.1} parent=1 // pred_check
      _
    $region11: #{forward.1} parent=1 // pred_check_branch
      %35 = sbr.rel (0) target = $region13
    $region12: #{forward.1} parent=1 // pred_region
      %s37 = ssub.s32 6016, 6016
      %38 = vsyncadd [#allocation5], %s37
      %s39 = sshll.u32 [#allocation6], 4
      %s40 = int_to_ptr.vmem [resolvable:$true] %s39
      %45 = dma.hbm_to_vmem [thread:$0]  %s2, 6016, %s40, [#allocation5], 128, 128, 8
    $region13: #{forward.1} parent=1 // pred_fallthru
      _
    // Predicated region
    $region14: #{forward.1} parent=1 // pred_check
      _
    $region15: #{forward.1} parent=1 // pred_check_branch
      %47 = sbr.rel (0) target = $region17
    $region16: #{forward.1} parent=1 // pred_region
      %48 = dma.done [#allocation3], 256
    $region17: #{forward.1} parent=1 // pred_fallthru
      _
    // Predicated region
    $region18: #{forward.1} parent=1 // pred_check
      _
    $region19: #{forward.1} parent=1 // pred_check_branch
      %50 = sbr.rel (0) target = $region21
    $region20: #{forward.1} parent=1 // pred_region
      %51 = dma.done [#allocation5], 64
    $region21: #{forward.1} parent=1 // pred_fallthru
      _
    // Predicated region
    $region22: #{forward.1} parent=1 // pred_check
      _
    $region23: #{forward.1} parent=1 // pred_check_branch
      %53 = sbr.rel (0) target = $region25
    $region24: #{forward.1} parent=1 // pred_region
      %54 = dma.done [#allocation5], 6016
    $region25: #{forward.1} parent=1 // pred_fallthru
      _
    %v55 = vld [vmem:[#allocation4] sm:$0x3]
    %v56 = vld [vmem:[#allocation4 + $0x2] sm:$0x3]
    %v57 = vunpack.c.0.s8 %v55
    %v58 = vunpack.c.0.s8 %v56
    %v59 = vcvt.s32.f32 %v57
    %v60 = vcvt.s32.f32 %v58
    %vm61 = vcmp.gt.f32.partialorder %v59, 0.0
    %vm62 = vcmp.gt.f32.partialorder %v60, 0.0
    %v63 = vsel %vm61, 0.0, -1e+30
    %v64 = vsel %vm62, 0.0, -1e+30
    %v65 = vld [vmem:[#allocation2] sm:$0xff]
    %v66 = vld [vmem:[#allocation2 + $0x8] sm:$0xff]
    %v67 = vld [vmem:[#allocation6] sm:$0xff]
    %v68 = vld [vmem:[#allocation6 + $0x8] sm:$0xff]
    %v69 = vld [vmem:[#allocation6 + $0x10] sm:$0xff]
    %v70 = vld [vmem:[#allocation6 + $0x18] sm:$0xff]
    %v71 = vld [vmem:[#allocation6 + $0x20] sm:$0xff]
    %v72 = vld [vmem:[#allocation6 + $0x28] sm:$0xff]
    %v73 = vld [vmem:[#allocation6 + $0x30] sm:$0xff]
    %v74 = vld [vmem:[#allocation6 + $0x38] sm:$0xff]
    %v75 = vld [vmem:[#allocation6 + $0x40] sm:$0x3]
    %v76 = vld [vmem:[#allocation6 + $0x48] sm:$0x3]
    %vm77 = vcmask 130048
    %v79 = vsel %vm77, %v65, 0
    %v82 = vsel %vm77, %v66, 0
    %v85 = vsel %vm77, %v67, 0
    %v88 = vsel %vm77, %v68, 0
    %v91 = vsel %vm77, %v69, 0
    %v94 = vsel %vm77, %v70, 0
    %v97 = vsel %vm77, %v71, 0
    %v100 = vsel %vm77, %v72, 0
    %v103 = vsel %vm77, %v73, 0
    %v106 = vsel %vm77, %v74, 0
    %108 = vmatprep.subr.mxu0 0.0
    %109 = vmatpush1.xpose.msra.mxu0 %v85
    %110 = vmatprep.subr.mxu0 0.0
    %111 = vmatpush1.xpose.msra.mxu0 %v88
    %112 = vmatprep.subr.mxu0 0.0
    %113 = vmatpush1.xpose.msra.mxu0 %v91
    %114 = vmatprep.subr.mxu0 0.0
    %115 = vmatpush1.xpose.msra.mxu0 %v94
    %116 = vmatprep.subr.mxu0 0.0
    %117 = vmatpush1.xpose.msra.mxu0 %v97
    %118 = vmatprep.subr.mxu0 0.0
    %119 = vmatpush1.xpose.msra.mxu0 %v100
    %120 = vmatprep.subr.mxu0 0.0
    %121 = vmatpush1.xpose.msra.mxu0 %v103
    %122 = vmatprep.subr.mxu0 0.0
    %123 = vmatpush1.xpose.msra.mxu0 %v106
    %124 = vmatprep.subr.mxu0 0.0
    %125 = vmatpush1.xpose.msra.mxu0 0.0
    %126 = vmatprep.subr.mxu0 0.0
    %127 = vmatpush1.xpose.msra.mxu0 0.0
    %128 = vmatprep.subr.mxu0 0.0
    %129 = vmatpush1.xpose.msra.mxu0 0.0
    %130 = vmatprep.subr.mxu0 0.0
    %131 = vmatpush1.xpose.msra.mxu0 0.0
    %132 = vmatprep.subr.mxu0 0.0
    %133 = vmatpush1.xpose.msra.mxu0 0.0
    %134 = vmatprep.subr.mxu0 0.0
    %135 = vmatpush1.xpose.msra.mxu0 0.0
    %136 = vmatprep.subr.mxu0 0.0
    %137 = vmatpush1.xpose.msra.mxu0 0.0
    %138 = vmatprep.subr.mxu0 0.0
    %139 = vmatpush1.xpose.msra.mxu0 0.0
    %140 = vmatprep.subr.mxu0 0.0
    %141 = vmatpush1.xpose.msra.mxu0 0.0
    %142 = vmatprep.subr.mxu0 0.0
    %143 = vmatpush1.xpose.msra.mxu0 0.0
    %144 = vmatprep.subr.mxu0 0.0
    %145 = vmatpush1.xpose.msra.mxu0 0.0
    %146 = vmatprep.subr.mxu0 0.0
    %147 = vmatpush1.xpose.msra.mxu0 0.0
    %148 = vmatprep.subr.mxu0 0.0
    %149 = vmatpush1.xpose.msra.mxu0 0.0
    %150 = vmatprep.subr.mxu0 0.0
    %151 = vmatpush1.xpose.msra.mxu0 0.0
    %152 = vmatprep.subr.mxu0 0.0
    %153 = vmatpush1.xpose.msra.mxu0 0.0
    %154 = vmatprep.subr.mxu0 0.0
    %155 = vmatpush1.xpose.msra.mxu0 0.0
    %156 = vmatprep.subr.mxu0 0.0
    %157 = vmatpush1.xpose.msra.mxu0 0.0
    %158 = vmatprep.subr.mxu0 0.0
    %159 = vmatpush1.xpose.msra.mxu0 0.0
    %160 = vmatprep.subr.mxu0 0.0
    %161 = vmatpush1.xpose.msra.mxu0 0.0
    %162 = vmatprep.subr.mxu0 0.0
    %163 = vmatpush1.xpose.msra.mxu0 0.0
    %164 = vmatprep.subr.mxu0 0.0
    %165 = vmatpush1.xpose.msra.mxu0 0.0
    %166 = vmatprep.subr.mxu0 0.0
    %167 = vmatpush1.xpose.msra.mxu0 0.0
    %168 = vmatprep.subr.mxu0 0.0
    %169 = vmatpush1.xpose.msra.mxu0 0.0
    %170 = vmatprep.subr.mxu0 0.0
    %171 = vmatpush1.xpose.msra.mxu0 0.0
    %172 = vmatprep.mubr.f32.mxu0 0.0
    %173 = vmatmul.mubr.f32.gmra.mrb[0].mxu0 %v79
    %v174 = vpop.f32.mrb[0].mxu0
    %v175 = vadd.f32 0.0, %v174
    %v176 = vpop.f32.mrb[0].mxu0
    %177 = vmatprep.mubr.f32.mxu0 0.0
    %178 = vmatmul.mubr.f32.gmra.mrb[0].mxu0 %v82
    %v179 = vpop.f32.mrb[0].mxu0
    %v180 = vadd.f32 0.0, %v179
    %v181 = vpop.f32.mrb[0].mxu0
    %182 = vdwg.mxu0
    %vm183 = vcmask 523264
    %v185 = vsel %vm183, %v75, 0
    %v188 = vsel %vm183, %v175, 0
    %v191 = vsel %vm183, %v180, 0
    %193 = vmatprep.subr.mxu0 0.0
    %194 = vmatpush1.xpose.msra.mxu0 %v188
    %195 = vmatprep.subr.mxu0 0.0
    %196 = vmatpush1.xpose.msra.mxu0 %v191
    %197 = vmatprep.subr.mxu0 0.0
    %198 = vmatpush1.xpose.msra.mxu0 0.0
    %199 = vmatprep.subr.mxu0 0.0
    %200 = vmatpush1.xpose.msra.mxu0 0.0
    %201 = vmatprep.subr.mxu0 0.0
    %202 = vmatpush1.xpose.msra.mxu0 0.0
    %203 = vmatprep.subr.mxu0 0.0
    %204 = vmatpush1.xpose.msra.mxu0 0.0
    %205 = vmatprep.subr.mxu0 0.0
    %206 = vmatpush1.xpose.msra.mxu0 0.0
    %207 = vmatprep.subr.mxu0 0.0
    %208 = vmatpush1.xpose.msra.mxu0 0.0
    %209 = vmatprep.subr.mxu0 0.0
    %210 = vmatpush1.xpose.msra.mxu0 0.0
    %211 = vmatprep.subr.mxu0 0.0
    %212 = vmatpush1.xpose.msra.mxu0 0.0
    %213 = vmatprep.subr.mxu0 0.0
    %214 = vmatpush1.xpose.msra.mxu0 0.0
    %215 = vmatprep.subr.mxu0 0.0
    %216 = vmatpush1.xpose.msra.mxu0 0.0
    %217 = vmatprep.subr.mxu0 0.0
    %218 = vmatpush1.xpose.msra.mxu0 0.0
    %219 = vmatprep.subr.mxu0 0.0
    %220 = vmatpush1.xpose.msra.mxu0 0.0
    %221 = vmatprep.subr.mxu0 0.0
    %222 = vmatpush1.xpose.msra.mxu0 0.0
    %223 = vmatprep.subr.mxu0 0.0
    %224 = vmatpush1.xpose.msra.mxu0 0.0
    %225 = vmatprep.subr.mxu0 0.0
    %226 = vmatpush1.xpose.msra.mxu0 0.0
    %227 = vmatprep.subr.mxu0 0.0
    %228 = vmatpush1.xpose.msra.mxu0 0.0
    %229 = vmatprep.subr.mxu0 0.0
    %230 = vmatpush1.xpose.msra.mxu0 0.0
    %231 = vmatprep.subr.mxu0 0.0
    %232 = vmatpush1.xpose.msra.mxu0 0.0
    %233 = vmatprep.subr.mxu0 0.0
    %234 = vmatpush1.xpose.msra.mxu0 0.0
    %235 = vmatprep.subr.mxu0 0.0
    %236 = vmatpush1.xpose.msra.mxu0 0.0
    %237 = vmatprep.subr.mxu0 0.0
    %238 = vmatpush1.xpose.msra.mxu0 0.0
    %239 = vmatprep.subr.mxu0 0.0
    %240 = vmatpush1.xpose.msra.mxu0 0.0
    %241 = vmatprep.subr.mxu0 0.0
    %242 = vmatpush1.xpose.msra.mxu0 0.0
    %243 = vmatprep.subr.mxu0 0.0
    %244 = vmatpush1.xpose.msra.mxu0 0.0
    %245 = vmatprep.subr.mxu0 0.0
    %246 = vmatpush1.xpose.msra.mxu0 0.0
    %247 = vmatprep.subr.mxu0 0.0
    %248 = vmatpush1.xpose.msra.mxu0 0.0
    %249 = vmatprep.subr.mxu0 0.0
    %250 = vmatpush1.xpose.msra.mxu0 0.0
    %251 = vmatprep.subr.mxu0 0.0
    %252 = vmatpush1.xpose.msra.mxu0 0.0
    %253 = vmatprep.subr.mxu0 0.0
    %254 = vmatpush1.xpose.msra.mxu0 0.0
    %255 = vmatprep.subr.mxu0 0.0
    %256 = vmatpush1.xpose.msra.mxu0 0.0
    %257 = vmatprep.mubr.f32.mxu0 0.0
    %258 = vmatmul.mubr.f32.gmra.mrb[0].mxu0 %v185
    %v259 = vpop.f32.mrb[0].mxu0
    %v260 = vadd.f32 0.0, %v259
    %v261 = vpop.f32.mrb[0].mxu0
    %262 = vdwg.mxu0
    %v264 = vsel %vm183, %v76, 0
    %266 = vmatprep.subr.mxu0 0.0
    %267 = vmatpush1.xpose.msra.mxu0 %v264
    %268 = vmatprep.subr.mxu0 0.0
    %269 = vmatpush1.xpose.msra.mxu0 0.0
    %270 = vmatprep.subr.mxu0 0.0
    %271 = vmatpush1.xpose.msra.mxu0 0.0
    %272 = vmatprep.subr.mxu0 0.0
    %273 = vmatpush1.xpose.msra.mxu0 0.0
    %274 = vmatprep.subr.mxu0 0.0
    %275 = vmatpush1.xpose.msra.mxu0 0.0
    %276 = vmatprep.subr.mxu0 0.0
    %277 = vmatpush1.xpose.msra.mxu0 0.0
    %278 = vmatprep.subr.mxu0 0.0
    %279 = vmatpush1.xpose.msra.mxu0 0.0
    %280 = vmatprep.subr.mxu0 0.0
    %281 = vmatpush1.xpose.msra.mxu0 0.0
    %282 = vmatprep.subr.mxu0 0.0
    %283 = vmatpush1.xpose.msra.mxu0 0.0
    %284 = vmatprep.subr.mxu0 0.0
    %285 = vmatpush1.xpose.msra.mxu0 0.0
    %286 = vmatprep.subr.mxu0 0.0
    %287 = vmatpush1.xpose.msra.mxu0 0.0
    %288 = vmatprep.subr.mxu0 0.0
    %289 = vmatpush1.xpose.msra.mxu0 0.0
    %290 = vmatprep.subr.mxu0 0.0
    %291 = vmatpush1.xpose.msra.mxu0 0.0
    %292 = vmatprep.subr.mxu0 0.0
    %293 = vmatpush1.xpose.msra.mxu0 0.0
    %294 = vmatprep.subr.mxu0 0.0
    %295 = vmatpush1.xpose.msra.mxu0 0.0
    %296 = vmatprep.subr.mxu0 0.0
    %297 = vmatpush1.xpose.msra.mxu0 0.0
    %298 = vmatprep.subr.mxu0 0.0
    %299 = vmatpush1.xpose.msra.mxu0 0.0
    %300 = vmatprep.subr.mxu0 0.0
    %301 = vmatpush1.xpose.msra.mxu0 0.0
    %302 = vmatprep.subr.mxu0 0.0
    %303 = vmatpush1.xpose.msra.mxu0 0.0
    %304 = vmatprep.subr.mxu0 0.0
    %305 = vmatpush1.xpose.msra.mxu0 0.0
    %306 = vmatprep.subr.mxu0 0.0
    %307 = vmatpush1.xpose.msra.mxu0 0.0
    %308 = vmatprep.subr.mxu0 0.0
    %309 = vmatpush1.xpose.msra.mxu0 0.0
    %310 = vmatprep.subr.mxu0 0.0
    %311 = vmatpush1.xpose.msra.mxu0 0.0
    %312 = vmatprep.subr.mxu0 0.0
    %313 = vmatpush1.xpose.msra.mxu0 0.0
    %314 = vmatprep.subr.mxu0 0.0
    %315 = vmatpush1.xpose.msra.mxu0 0.0
    %316 = vmatprep.subr.mxu0 0.0
    %317 = vmatpush1.xpose.msra.mxu0 0.0
    %318 = vmatprep.subr.mxu0 0.0
    %319 = vmatpush1.xpose.msra.mxu0 0.0
    %320 = vmatprep.subr.mxu0 0.0
    %321 = vmatpush1.xpose.msra.mxu0 0.0
    %322 = vmatprep.subr.mxu0 0.0
    %323 = vmatpush1.xpose.msra.mxu0 0.0
    %324 = vmatprep.subr.mxu0 0.0
    %325 = vmatpush1.xpose.msra.mxu0 0.0
    %326 = vmatprep.subr.mxu0 0.0
    %327 = vmatpush1.xpose.msra.mxu0 0.0
    %328 = vmatprep.subr.mxu0 0.0
    %329 = vmatpush1.xpose.msra.mxu0 0.0
    %330 = vmatprep.mubr.f32.mxu0 0.0
    %331 = vmatmul.mubr.f32.gmra.mrb[0].mxu0 %v188
    %v332 = vpop.f32.mrb[0].mxu0
    %v333 = vadd.f32 0.0, %v332
    %v334 = vpop.f32.mrb[0].mxu0
    %335 = vmatprep.mubr.f32.mxu0 0.0
    %336 = vmatmul.mubr.f32.gmra.mrb[0].mxu0 %v191
    %v337 = vpop.f32.mrb[0].mxu0
    %v338 = vadd.f32 0.0, %v337
    %v339 = vpop.f32.mrb[0].mxu0
    %340 = vdwg.mxu0
    %342 = vset.pattern.permute.xlu0 0
    %343 = vperm.xlu0 %342, %v333
    %v344 = vpop.permute.xlu0 %343
    %347 = vset.pattern.permute.xlu0 0
    %348 = vperm.xlu0 %347, %v338
    %v349 = vpop.permute.xlu0 %348
    %v351 = vlaneseq
    %v352 = vshrl.u32 %v351, 7
    %v353 = vsub.s32 0, %v352
    %v354 = vrot.slane %v260, %v353
    %v355 = vadd.f32 %v344, %v354
    %v356 = vadd.f32 %v349, %v354
    %vm357 = vcmp.gt.f32.partialorder %v355, 0.0
    %vm358 = vcmp.gt.f32.partialorder %v356, 0.0
    %v359 = vmul.f32 %v355, 0.01
    %v360 = vmul.f32 %v356, 0.01
    %v361 = vsel %vm357, %v355, %v359
    %v362 = vsel %vm358, %v356, %v360
    %v363 = vadd.f32 %v361, %v63
    %v364 = vadd.f32 %v362, %v64
    %v365 = vsel %vm77, %v363, -inf
    %366 = vmax.xlane.f32.xlu0 %v365
    %v367 = vpop.xlane.xlu0 %366
    %v368 = vsel %vm77, %v364, -inf
    %369 = vmax.xlane.f32.xlu0 %v368
    %v370 = vpop.xlane.xlu0 %369
    %v371 = vsub.f32 %v363, %v367
    %v372 = vsub.f32 %v364, %v370
    %v373 = vmul.f32 %v371, 1.442695
    %v374 = vpow.pop %v373
    %v375 = vmul.f32 %v372, 1.442695
    %v376 = vpow.pop %v375
    %v377 = vsel %vm77, %v374, 0.0
    %378 = vadd.xlane.f32.xlu0 %v377
    %v379 = vpop.xlane.xlu0 %378
    %v380 = vsel %vm77, %v376, 0.0
    %381 = vadd.xlane.f32.xlu0 %v380
    %v382 = vpop.xlane.xlu0 %381
    %v383 = vrcp.pop %v379
    %v384 = vrcp.pop %v382
    %v385 = vmul.f32 %v379, %v383
    %v386 = vmul.f32 %v382, %v384
    %v387 = vsub.f32 2.0, %v385
    %v388 = vsub.f32 2.0, %v386
    %v389 = vmul.f32 %v383, %v387
    %v390 = vmul.f32 %v384, %v388
    %v391 = vmul.f32 %v374, %v389
    %v392 = vmul.f32 %v376, %v390
    %v394 = vsel %vm77, %v391, 0
    %v397 = vsel %vm77, %v392, 0
    %399 = vmatprep.subr.mxu0 0.0
    %400 = vmatpush1.msra.mxu0 %v175
    %401 = vmatprep.subr.mxu0 0.0
    %402 = vmatpush1.msra.mxu0 %v180
    %403 = vmatprep.subr.mxu0 0.0
    %404 = vmatpush1.msra.mxu0 0.0
    %405 = vmatprep.subr.mxu0 0.0
    %406 = vmatpush1.msra.mxu0 0.0
    %407 = vmatprep.subr.mxu0 0.0
    %408 = vmatpush1.msra.mxu0 0.0
    %409 = vmatprep.subr.mxu0 0.0
    %410 = vmatpush1.msra.mxu0 0.0
    %411 = vmatprep.subr.mxu0 0.0
    %412 = vmatpush1.msra.mxu0 0.0
    %413 = vmatprep.subr.mxu0 0.0
    %414 = vmatpush1.msra.mxu0 0.0
    %415 = vmatprep.subr.mxu0 0.0
    %416 = vmatpush1.msra.mxu0 0.0
    %417 = vmatprep.subr.mxu0 0.0
    %418 = vmatpush1.msra.mxu0 0.0
    %419 = vmatprep.subr.mxu0 0.0
    %420 = vmatpush1.msra.mxu0 0.0
    %421 = vmatprep.subr.mxu0 0.0
    %422 = vmatpush1.msra.mxu0 0.0
    %423 = vmatprep.subr.mxu0 0.0
    %424 = vmatpush1.msra.mxu0 0.0
    %425 = vmatprep.subr.mxu0 0.0
    %426 = vmatpush1.msra.mxu0 0.0
    %427 = vmatprep.subr.mxu0 0.0
    %428 = vmatpush1.msra.mxu0 0.0
    %429 = vmatprep.subr.mxu0 0.0
    %430 = vmatpush1.msra.mxu0 0.0
    %431 = vmatprep.subr.mxu0 0.0
    %432 = vmatpush1.msra.mxu0 0.0
    %433 = vmatprep.subr.mxu0 0.0
    %434 = vmatpush1.msra.mxu0 0.0
    %435 = vmatprep.subr.mxu0 0.0
    %436 = vmatpush1.msra.mxu0 0.0
    %437 = vmatprep.subr.mxu0 0.0
    %438 = vmatpush1.msra.mxu0 0.0
    %439 = vmatprep.subr.mxu0 0.0
    %440 = vmatpush1.msra.mxu0 0.0
    %441 = vmatprep.subr.mxu0 0.0
    %442 = vmatpush1.msra.mxu0 0.0
    %443 = vmatprep.subr.mxu0 0.0
    %444 = vmatpush1.msra.mxu0 0.0
    %445 = vmatprep.subr.mxu0 0.0
    %446 = vmatpush1.msra.mxu0 0.0
    %447 = vmatprep.subr.mxu0 0.0
    %448 = vmatpush1.msra.mxu0 0.0
    %449 = vmatprep.subr.mxu0 0.0
    %450 = vmatpush1.msra.mxu0 0.0
    %451 = vmatprep.subr.mxu0 0.0
    %452 = vmatpush1.msra.mxu0 0.0
    %453 = vmatprep.subr.mxu0 0.0
    %454 = vmatpush1.msra.mxu0 0.0
    %455 = vmatprep.subr.mxu0 0.0
    %456 = vmatpush1.msra.mxu0 0.0
    %457 = vmatprep.subr.mxu0 0.0
    %458 = vmatpush1.msra.mxu0 0.0
    %459 = vmatprep.subr.mxu0 0.0
    %460 = vmatpush1.msra.mxu0 0.0
    %461 = vmatprep.subr.mxu0 0.0
    %462 = vmatpush1.msra.mxu0 0.0
    %463 = vmatprep.mubr.f32.mxu0 0.0
    %464 = vmatmul.mubr.f32.gmra.mrb[0].mxu0 %v394
    %v465 = vpop.f32.mrb[0].mxu0
    %v466 = vadd.f32 0.0, %v465
    %v467 = vpop.f32.mrb[0].mxu0
    %468 = vmatprep.mubr.f32.mxu0 0.0
    %469 = vmatmul.mubr.f32.gmra.mrb[0].mxu0 %v397
    %v470 = vpop.f32.mrb[0].mxu0
    %v471 = vadd.f32 0.0, %v470
    %v472 = vpop.f32.mrb[0].mxu0
    %473 = vdwg.mxu0
    %474 = vset.pattern.permute.xlu0 1
    %475 = vperm.xlu0 %474, %v333
    %v476 = vpop.permute.xlu0 %475
    %478 = vset.pattern.permute.xlu0 1
    %479 = vperm.xlu0 %478, %v338
    %v480 = vpop.permute.xlu0 %479
    %v482 = vlaneseq
    %v483 = vshrl.u32 %v482, 7
    %v484 = vsub.s32 1, %v483
    %v485 = vrot.slane %v260, %v484
    %v486 = vadd.f32 %v476, %v485
    %v487 = vadd.f32 %v480, %v485
    %vm488 = vcmp.gt.f32.partialorder %v486, 0.0
    %vm489 = vcmp.gt.f32.partialorder %v487, 0.0
    %v490 = vmul.f32 %v486, 0.01
    %v491 = vmul.f32 %v487, 0.01
    %v492 = vsel %vm488, %v486, %v490
    %v493 = vsel %vm489, %v487, %v491
    %v494 = vadd.f32 %v492, %v63
    %v495 = vadd.f32 %v493, %v64
    %v496 = vsel %vm77, %v494, -inf
    %497 = vmax.xlane.f32.xlu0 %v496
    %v498 = vpop.xlane.xlu0 %497
    %v499 = vsel %vm77, %v495, -inf
    %500 = vmax.xlane.f32.xlu0 %v499
    %v501 = vpop.xlane.xlu0 %500
    %v502 = vsub.f32 %v494, %v498
    %v503 = vsub.f32 %v495, %v501
    %v504 = vmul.f32 %v502, 1.442695
    %v505 = vpow.pop %v504
    %v506 = vmul.f32 %v503, 1.442695
    %v507 = vpow.pop %v506
    %v508 = vsel %vm77, %v505, 0.0
    %509 = vadd.xlane.f32.xlu0 %v508
    %v510 = vpop.xlane.xlu0 %509
    %v511 = vsel %vm77, %v507, 0.0
    %512 = vadd.xlane.f32.xlu0 %v511
    %v513 = vpop.xlane.xlu0 %512
    %v514 = vrcp.pop %v510
    %v515 = vrcp.pop %v513
    %v516 = vmul.f32 %v510, %v514
    %v517 = vmul.f32 %v513, %v515
    %v518 = vsub.f32 2.0, %v516
    %v519 = vsub.f32 2.0, %v517
    %v520 = vmul.f32 %v514, %v518
    %v521 = vmul.f32 %v515, %v519
    %v522 = vmul.f32 %v505, %v520
    %v523 = vmul.f32 %v507, %v521
    %524 = vrot.lane.b32.xlu0 %v175, 96
    %v525 = vpop.permute.xlu0 %524
    %526 = vrot.lane.b32.xlu0 %v180, 96
    %v527 = vpop.permute.xlu0 %526
    %v531 = vsel %vm77, %v522, 0
    %v534 = vsel %vm77, %v523, 0
    %536 = vmatprep.subr.mxu0 0.0
    %537 = vmatpush1.msra.mxu0 %v525
    %538 = vmatprep.subr.mxu0 0.0
    %539 = vmatpush1.msra.mxu0 %v527
    %540 = vmatprep.subr.mxu0 0.0
    %541 = vmatpush1.msra.mxu0 0.0
    %542 = vmatprep.subr.mxu0 0.0
    %543 = vmatpush1.msra.mxu0 0.0
    %544 = vmatprep.subr.mxu0 0.0
    %545 = vmatpush1.msra.mxu0 0.0
    %546 = vmatprep.subr.mxu0 0.0
    %547 = vmatpush1.msra.mxu0 0.0
    %548 = vmatprep.subr.mxu0 0.0
    %549 = vmatpush1.msra.mxu0 0.0
    %550 = vmatprep.subr.mxu0 0.0
    %551 = vmatpush1.msra.mxu0 0.0
    %552 = vmatprep.subr.mxu0 0.0
    %553 = vmatpush1.msra.mxu0 0.0
    %554 = vmatprep.subr.mxu0 0.0
    %555 = vmatpush1.msra.mxu0 0.0
    %556 = vmatprep.subr.mxu0 0.0
    %557 = vmatpush1.msra.mxu0 0.0
    %558 = vmatprep.subr.mxu0 0.0
    %559 = vmatpush1.msra.mxu0 0.0
    %560 = vmatprep.subr.mxu0 0.0
    %561 = vmatpush1.msra.mxu0 0.0
    %562 = vmatprep.subr.mxu0 0.0
    %563 = vmatpush1.msra.mxu0 0.0
    %564 = vmatprep.subr.mxu0 0.0
    %565 = vmatpush1.msra.mxu0 0.0
    %566 = vmatprep.subr.mxu0 0.0
    %567 = vmatpush1.msra.mxu0 0.0
    %568 = vmatprep.subr.mxu0 0.0
    %569 = vmatpush1.msra.mxu0 0.0
    %570 = vmatprep.subr.mxu0 0.0
    %571 = vmatpush1.msra.mxu0 0.0
    %572 = vmatprep.subr.mxu0 0.0
    %573 = vmatpush1.msra.mxu0 0.0
    %574 = vmatprep.subr.mxu0 0.0
    %575 = vmatpush1.msra.mxu0 0.0
    %576 = vmatprep.subr.mxu0 0.0
    %577 = vmatpush1.msra.mxu0 0.0
    %578 = vmatprep.subr.mxu0 0.0
    %579 = vmatpush1.msra.mxu0 0.0
    %580 = vmatprep.subr.mxu0 0.0
    %581 = vmatpush1.msra.mxu0 0.0
    %582 = vmatprep.subr.mxu0 0.0
    %583 = vmatpush1.msra.mxu0 0.0
    %584 = vmatprep.subr.mxu0 0.0
    %585 = vmatpush1.msra.mxu0 0.0
    %586 = vmatprep.subr.mxu0 0.0
    %587 = vmatpush1.msra.mxu0 0.0
    %588 = vmatprep.subr.mxu0 0.0
    %589 = vmatpush1.msra.mxu0 0.0
    %590 = vmatprep.subr.mxu0 0.0
    %591 = vmatpush1.msra.mxu0 0.0
    %592 = vmatprep.subr.mxu0 0.0
    %593 = vmatpush1.msra.mxu0 0.0
    %594 = vmatprep.subr.mxu0 0.0
    %595 = vmatpush1.msra.mxu0 0.0
    %596 = vmatprep.subr.mxu0 0.0
    %597 = vmatpush1.msra.mxu0 0.0
    %598 = vmatprep.subr.mxu0 0.0
    %599 = vmatpush1.msra.mxu0 0.0
    %600 = vmatprep.mubr.f32.mxu0 0.0
    %601 = vmatmul.mubr.f32.gmra.mrb[0].mxu0 %v531
    %v602 = vpop.f32.mrb[0].mxu0
    %v603 = vadd.f32 0.0, %v602
    %v604 = vpop.f32.mrb[0].mxu0
    %605 = vmatprep.mubr.f32.mxu0 0.0
    %606 = vmatmul.mubr.f32.gmra.mrb[0].mxu0 %v534
    %v607 = vpop.f32.mrb[0].mxu0
    %v608 = vadd.f32 0.0, %v607
    %v609 = vpop.f32.mrb[0].mxu0
    %610 = vdwg.mxu0
    %613 = vrot.lane.b32.xlu0 %v603, 32
    %v614 = vpop.permute.xlu0 %613
    %615 = vrot.lane.b32.xlu0 %v608, 32
    %v616 = vpop.permute.xlu0 %615
    %vm619 = vcmask 261120
    %v620 = vsel %vm619, %v466, %v614
    %v621 = vsel %vm619, %v471, %v616
    %v622 = vmax.f32 %v620, 0.0
    %v623 = vmax.f32 %v621, 0.0
    %v624 = vld [vmem:[#allocation6 + $0x50] sm:$0xff]
    %v625 = vld [vmem:[#allocation6 + $0x58] sm:$0xff]
    %v626 = vld [vmem:[#allocation6 + $0x60] sm:$0xff]
    %v627 = vld [vmem:[#allocation6 + $0x68] sm:$0xff]
    %v628 = vld [vmem:[#allocation6 + $0x70] sm:$0xff]
    %v629 = vld [vmem:[#allocation6 + $0x78] sm:$0xff]
    %v630 = vld [vmem:[#allocation6 + $0x80] sm:$0xff]
    %v631 = vld [vmem:[#allocation6 + $0x88] sm:$0xff]
    %v632 = vld [vmem:[#allocation6 + $0x90] sm:$0x1]
    %v633 = vld [vmem:[#allocation6 + $0x98] sm:$0x1]
    %v635 = vsel %vm183, %v622, 0
    %v638 = vsel %vm183, %v623, 0
    %v641 = vsel %vm183, %v624, 0
    %v644 = vsel %vm183, %v625, 0
    %v647 = vsel %vm183, %v626, 0
    %v650 = vsel %vm183, %v627, 0
    %v653 = vsel %vm183, %v628, 0
    %v656 = vsel %vm183, %v629, 0
    %v659 = vsel %vm183, %v630, 0
    %v662 = vsel %vm183, %v631, 0
    %664 = vmatprep.subr.mxu0 0.0
    %665 = vmatpush1.xpose.msra.mxu0 %v641
    %666 = vmatprep.subr.mxu0 0.0
    %667 = vmatpush1.xpose.msra.mxu0 %v644
    %668 = vmatprep.subr.mxu0 0.0
    %669 = vmatpush1.xpose.msra.mxu0 %v647
    %670 = vmatprep.subr.mxu0 0.0
    %671 = vmatpush1.xpose.msra.mxu0 %v650
    %672 = vmatprep.subr.mxu0 0.0
    %673 = vmatpush1.xpose.msra.mxu0 %v653
    %674 = vmatprep.subr.mxu0 0.0
    %675 = vmatpush1.xpose.msra.mxu0 %v656
    %676 = vmatprep.subr.mxu0 0.0
    %677 = vmatpush1.xpose.msra.mxu0 %v659
    %678 = vmatprep.subr.mxu0 0.0
    %679 = vmatpush1.xpose.msra.mxu0 %v662
    %680 = vmatprep.subr.mxu0 0.0
    %681 = vmatpush1.xpose.msra.mxu0 0.0
    %682 = vmatprep.subr.mxu0 0.0
    %683 = vmatpush1.xpose.msra.mxu0 0.0
    %684 = vmatprep.subr.mxu0 0.0
    %685 = vmatpush1.xpose.msra.mxu0 0.0
    %686 = vmatprep.subr.mxu0 0.0
    %687 = vmatpush1.xpose.msra.mxu0 0.0
    %688 = vmatprep.subr.mxu0 0.0
    %689 = vmatpush1.xpose.msra.mxu0 0.0
    %690 = vmatprep.subr.mxu0 0.0
    %691 = vmatpush1.xpose.msra.mxu0 0.0
    %692 = vmatprep.subr.mxu0 0.0
    %693 = vmatpush1.xpose.msra.mxu0 0.0
    %694 = vmatprep.subr.mxu0 0.0
    %695 = vmatpush1.xpose.msra.mxu0 0.0
    %696 = vmatprep.subr.mxu0 0.0
    %697 = vmatpush1.xpose.msra.mxu0 0.0
    %698 = vmatprep.subr.mxu0 0.0
    %699 = vmatpush1.xpose.msra.mxu0 0.0
    %700 = vmatprep.subr.mxu0 0.0
    %701 = vmatpush1.xpose.msra.mxu0 0.0
    %702 = vmatprep.subr.mxu0 0.0
    %703 = vmatpush1.xpose.msra.mxu0 0.0
    %704 = vmatprep.subr.mxu0 0.0
    %705 = vmatpush1.xpose.msra.mxu0 0.0
    %706 = vmatprep.subr.mxu0 0.0
    %707 = vmatpush1.xpose.msra.mxu0 0.0
    %708 = vmatprep.subr.mxu0 0.0
    %709 = vmatpush1.xpose.msra.mxu0 0.0
    %710 = vmatprep.subr.mxu0 0.0
    %711 = vmatpush1.xpose.msra.mxu0 0.0
    %712 = vmatprep.subr.mxu0 0.0
    %713 = vmatpush1.xpose.msra.mxu0 0.0
    %714 = vmatprep.subr.mxu0 0.0
    %715 = vmatpush1.xpose.msra.mxu0 0.0
    %716 = vmatprep.subr.mxu0 0.0
    %717 = vmatpush1.xpose.msra.mxu0 0.0
    %718 = vmatprep.subr.mxu0 0.0
    %719 = vmatpush1.xpose.msra.mxu0 0.0
    %720 = vmatprep.subr.mxu0 0.0
    %721 = vmatpush1.xpose.msra.mxu0 0.0
    %722 = vmatprep.subr.mxu0 0.0
    %723 = vmatpush1.xpose.msra.mxu0 0.0
    %724 = vmatprep.subr.mxu0 0.0
    %725 = vmatpush1.xpose.msra.mxu0 0.0
    %726 = vmatprep.subr.mxu0 0.0
    %727 = vmatpush1.xpose.msra.mxu0 0.0
    %728 = vmatprep.mubr.f32.mxu0 0.0
    %729 = vmatmul.mubr.f32.gmra.mrb[0].mxu0 %v635
    %v730 = vpop.f32.mrb[0].mxu0
    %v731 = vadd.f32 0.0, %v730
    %v732 = vpop.f32.mrb[0].mxu0
    %733 = vmatprep.mubr.f32.mxu0 0.0
    %734 = vmatmul.mubr.f32.gmra.mrb[0].mxu0 %v638
    %v735 = vpop.f32.mrb[0].mxu0
    %v736 = vadd.f32 0.0, %v735
    %v737 = vpop.f32.mrb[0].mxu0
    %738 = vdwg.mxu0
    %v740 = vsel %vm183, %v632, 0
    %v743 = vsel %vm183, %v731, 0
    %v746 = vsel %vm183, %v736, 0
    %748 = vmatprep.subr.mxu0 0.0
    %749 = vmatpush1.xpose.msra.mxu0 %v743
    %750 = vmatprep.subr.mxu0 0.0
    %751 = vmatpush1.xpose.msra.mxu0 %v746
    %752 = vmatprep.subr.mxu0 0.0
    %753 = vmatpush1.xpose.msra.mxu0 0.0
    %754 = vmatprep.subr.mxu0 0.0
    %755 = vmatpush1.xpose.msra.mxu0 0.0
    %756 = vmatprep.subr.mxu0 0.0
    %757 = vmatpush1.xpose.msra.mxu0 0.0
    %758 = vmatprep.subr.mxu0 0.0
    %759 = vmatpush1.xpose.msra.mxu0 0.0
    %760 = vmatprep.subr.mxu0 0.0
    %761 = vmatpush1.xpose.msra.mxu0 0.0
    %762 = vmatprep.subr.mxu0 0.0
    %763 = vmatpush1.xpose.msra.mxu0 0.0
    %764 = vmatprep.subr.mxu0 0.0
    %765 = vmatpush1.xpose.msra.mxu0 0.0
    %766 = vmatprep.subr.mxu0 0.0
    %767 = vmatpush1.xpose.msra.mxu0 0.0
    %768 = vmatprep.subr.mxu0 0.0
    %769 = vmatpush1.xpose.msra.mxu0 0.0
    %770 = vmatprep.subr.mxu0 0.0
    %771 = vmatpush1.xpose.msra.mxu0 0.0
    %772 = vmatprep.subr.mxu0 0.0
    %773 = vmatpush1.xpose.msra.mxu0 0.0
    %774 = vmatprep.subr.mxu0 0.0
    %775 = vmatpush1.xpose.msra.mxu0 0.0
    %776 = vmatprep.subr.mxu0 0.0
    %777 = vmatpush1.xpose.msra.mxu0 0.0
    %778 = vmatprep.subr.mxu0 0.0
    %779 = vmatpush1.xpose.msra.mxu0 0.0
    %780 = vmatprep.subr.mxu0 0.0
    %781 = vmatpush1.xpose.msra.mxu0 0.0
    %782 = vmatprep.subr.mxu0 0.0
    %783 = vmatpush1.xpose.msra.mxu0 0.0
    %784 = vmatprep.subr.mxu0 0.0
    %785 = vmatpush1.xpose.msra.mxu0 0.0
    %786 = vmatprep.subr.mxu0 0.0
    %787 = vmatpush1.xpose.msra.mxu0 0.0
    %788 = vmatprep.subr.mxu0 0.0
    %789 = vmatpush1.xpose.msra.mxu0 0.0
    %790 = vmatprep.subr.mxu0 0.0
    %791 = vmatpush1.xpose.msra.mxu0 0.0
    %792 = vmatprep.subr.mxu0 0.0
    %793 = vmatpush1.xpose.msra.mxu0 0.0
    %794 = vmatprep.subr.mxu0 0.0
    %795 = vmatpush1.xpose.msra.mxu0 0.0
    %796 = vmatprep.subr.mxu0 0.0
    %797 = vmatpush1.xpose.msra.mxu0 0.0
    %798 = vmatprep.subr.mxu0 0.0
    %799 = vmatpush1.xpose.msra.mxu0 0.0
    %800 = vmatprep.subr.mxu0 0.0
    %801 = vmatpush1.xpose.msra.mxu0 0.0
    %802 = vmatprep.subr.mxu0 0.0
    %803 = vmatpush1.xpose.msra.mxu0 0.0
    %804 = vmatprep.subr.mxu0 0.0
    %805 = vmatpush1.xpose.msra.mxu0 0.0
    %806 = vmatprep.subr.mxu0 0.0
    %807 = vmatpush1.xpose.msra.mxu0 0.0
    %808 = vmatprep.subr.mxu0 0.0
    %809 = vmatpush1.xpose.msra.mxu0 0.0
    %810 = vmatprep.subr.mxu0 0.0
    %811 = vmatpush1.xpose.msra.mxu0 0.0
    %812 = vmatprep.mubr.f32.mxu0 0.0
    %813 = vmatmul.mubr.f32.gmra.mrb[0].mxu0 %v740
    %v814 = vpop.f32.mrb[0].mxu0
    %v815 = vadd.f32 0.0, %v814
    %v816 = vpop.f32.mrb[0].mxu0
    %817 = vdwg.mxu0
    %v818 = vlaneseq
    %v819 = vshrl.u32 %v818, 7
    %v820 = vsub.s32 0, %v819
    %v821 = vrot.slane %v633, %v820
    %v822 = vmul.f32 %v731, %v821
    %v823 = vmul.f32 %v736, %v821
    %v824 = vsel %vm183, %v822, 0.0
    %825 = vadd.xlane.f32.xlu0 %v824
    %v826 = vpop.xlane.xlu0 %825
    %v827 = vsel %vm183, %v823, 0.0
    %828 = vadd.xlane.f32.xlu0 %v827
    %v829 = vpop.xlane.xlu0 %828
    %v830 = vlaneseq
    %v831 = vshrl.u32 %v830, 7
    %v832 = vsub.s32 0, %v831
    %v833 = vrot.slane %v815, %v832
    %v834 = vadd.f32 %v826, %v833
    %v835 = vadd.f32 %v829, %v833
    %vm836 = vcmp.gt.f32.partialorder %v834, 0.0
    %vm837 = vcmp.gt.f32.partialorder %v835, 0.0
    %v838 = vmul.f32 %v834, 0.01
    %v839 = vmul.f32 %v835, 0.01
    %v840 = vsel %vm836, %v834, %v838
    %v841 = vsel %vm837, %v835, %v839
    %v842 = vadd.f32 %v840, %v63
    %v843 = vadd.f32 %v841, %v64
    %v844 = vsel %vm77, %v842, -inf
    %845 = vmax.xlane.f32.xlu0 %v844
    %v846 = vpop.xlane.xlu0 %845
    %v847 = vsel %vm77, %v843, -inf
    %848 = vmax.xlane.f32.xlu0 %v847
    %v849 = vpop.xlane.xlu0 %848
    %v850 = vsub.f32 %v842, %v846
    %v851 = vsub.f32 %v843, %v849
    %v852 = vmul.f32 %v850, 1.442695
    %v853 = vpow.pop %v852
    %v854 = vmul.f32 %v851, 1.442695
    %v855 = vpow.pop %v854
    %v856 = vsel %vm77, %v853, 0.0
    %857 = vadd.xlane.f32.xlu0 %v856
    %v858 = vpop.xlane.xlu0 %857
    %v859 = vsel %vm77, %v855, 0.0
    %860 = vadd.xlane.f32.xlu0 %v859
    %v861 = vpop.xlane.xlu0 %860
    %v862 = vrcp.pop %v858
    %v863 = vrcp.pop %v861
    %v864 = vmul.f32 %v858, %v862
    %v865 = vmul.f32 %v861, %v863
    %v866 = vsub.f32 2.0, %v864
    %v867 = vsub.f32 2.0, %v865
    %v868 = vmul.f32 %v862, %v866
    %v869 = vmul.f32 %v863, %v867
    %v870 = vmul.f32 %v853, %v868
    %v871 = vmul.f32 %v855, %v869
    %v873 = vsel %vm77, %v870, 0
    %v876 = vsel %vm77, %v871, 0
    %878 = vmatprep.subr.mxu0 0.0
    %879 = vmatpush1.msra.mxu0 %v731
    %880 = vmatprep.subr.mxu0 0.0
    %881 = vmatpush1.msra.mxu0 %v736
    %882 = vmatprep.subr.mxu0 0.0
    %883 = vmatpush1.msra.mxu0 0.0
    %884 = vmatprep.subr.mxu0 0.0
    %885 = vmatpush1.msra.mxu0 0.0
    %886 = vmatprep.subr.mxu0 0.0
    %887 = vmatpush1.msra.mxu0 0.0
    %888 = vmatprep.subr.mxu0 0.0
    %889 = vmatpush1.msra.mxu0 0.0
    %890 = vmatprep.subr.mxu0 0.0
    %891 = vmatpush1.msra.mxu0 0.0
    %892 = vmatprep.subr.mxu0 0.0
    %893 = vmatpush1.msra.mxu0 0.0
    %894 = vmatprep.subr.mxu0 0.0
    %895 = vmatpush1.msra.mxu0 0.0
    %896 = vmatprep.subr.mxu0 0.0
    %897 = vmatpush1.msra.mxu0 0.0
    %898 = vmatprep.subr.mxu0 0.0
    %899 = vmatpush1.msra.mxu0 0.0
    %900 = vmatprep.subr.mxu0 0.0
    %901 = vmatpush1.msra.mxu0 0.0
    %902 = vmatprep.subr.mxu0 0.0
    %903 = vmatpush1.msra.mxu0 0.0
    %904 = vmatprep.subr.mxu0 0.0
    %905 = vmatpush1.msra.mxu0 0.0
    %906 = vmatprep.subr.mxu0 0.0
    %907 = vmatpush1.msra.mxu0 0.0
    %908 = vmatprep.subr.mxu0 0.0
    %909 = vmatpush1.msra.mxu0 0.0
    %910 = vmatprep.subr.mxu0 0.0
    %911 = vmatpush1.msra.mxu0 0.0
    %912 = vmatprep.subr.mxu0 0.0
    %913 = vmatpush1.msra.mxu0 0.0
    %914 = vmatprep.subr.mxu0 0.0
    %915 = vmatpush1.msra.mxu0 0.0
    %916 = vmatprep.subr.mxu0 0.0
    %917 = vmatpush1.msra.mxu0 0.0
    %918 = vmatprep.subr.mxu0 0.0
    %919 = vmatpush1.msra.mxu0 0.0
    %920 = vmatprep.subr.mxu0 0.0
    %921 = vmatpush1.msra.mxu0 0.0
    %922 = vmatprep.subr.mxu0 0.0
    %923 = vmatpush1.msra.mxu0 0.0
    %924 = vmatprep.subr.mxu0 0.0
    %925 = vmatpush1.msra.mxu0 0.0
    %926 = vmatprep.subr.mxu0 0.0
    %927 = vmatpush1.msra.mxu0 0.0
    %928 = vmatprep.subr.mxu0 0.0
    %929 = vmatpush1.msra.mxu0 0.0
    %930 = vmatprep.subr.mxu0 0.0
    %931 = vmatpush1.msra.mxu0 0.0
    %932 = vmatprep.subr.mxu0 0.0
    %933 = vmatpush1.msra.mxu0 0.0
    %934 = vmatprep.subr.mxu0 0.0
    %935 = vmatpush1.msra.mxu0 0.0
    %936 = vmatprep.subr.mxu0 0.0
    %937 = vmatpush1.msra.mxu0 0.0
    %938 = vmatprep.subr.mxu0 0.0
    %939 = vmatpush1.msra.mxu0 0.0
    %940 = vmatprep.subr.mxu0 0.0
    %941 = vmatpush1.msra.mxu0 0.0
    %942 = vmatprep.mubr.f32.mxu0 0.0
    %943 = vmatmul.mubr.f32.gmra.mrb[0].mxu0 %v873
    %v944 = vpop.f32.mrb[0].mxu0
    %v945 = vadd.f32 0.0, %v944
    %v946 = vpop.f32.mrb[0].mxu0
    %947 = vmatprep.mubr.f32.mxu0 0.0
    %948 = vmatmul.mubr.f32.gmra.mrb[0].mxu0 %v876
    %v949 = vpop.f32.mrb[0].mxu0
    %v950 = vadd.f32 0.0, %v949
    %v951 = vpop.f32.mrb[0].mxu0
    %952 = vdwg.mxu0
    %v953 = vmax.f32 %v945, 0.0
    %v954 = vmax.f32 %v950, 0.0
    %v955 = vld [vmem:[#allocation6 + $0xa0] sm:$0xff]
    %v956 = vld [vmem:[#allocation6 + $0xa8] sm:$0xff]
    %v957 = vld [vmem:[#allocation6 + $0xb0] sm:$0xff]
    %v958 = vld [vmem:[#allocation6 + $0xb8] sm:$0xff]
    %v959 = vld [vmem:[#allocation6 + $0xc0] sm:$0x1]
    %v960 = vld [vmem:[#allocation6 + $0xc8] sm:$0x1]
    %v962 = vsel %vm183, %v953, 0
    %v965 = vsel %vm183, %v954, 0
    %v968 = vsel %vm183, %v955, 0
    %v971 = vsel %vm183, %v956, 0
    %v974 = vsel %vm183, %v957, 0
    %v977 = vsel %vm183, %v958, 0
    %979 = vmatprep.subr.mxu0 0.0
    %980 = vmatpush1.xpose.msra.mxu0 %v968
    %981 = vmatprep.subr.mxu0 0.0
    %982 = vmatpush1.xpose.msra.mxu0 %v971
    %983 = vmatprep.subr.mxu0 0.0
    %984 = vmatpush1.xpose.msra.mxu0 %v974
    %985 = vmatprep.subr.mxu0 0.0
    %986 = vmatpush1.xpose.msra.mxu0 %v977
    %987 = vmatprep.subr.mxu0 0.0
    %988 = vmatpush1.xpose.msra.mxu0 0.0
    %989 = vmatprep.subr.mxu0 0.0
    %990 = vmatpush1.xpose.msra.mxu0 0.0
    %991 = vmatprep.subr.mxu0 0.0
    %992 = vmatpush1.xpose.msra.mxu0 0.0
    %993 = vmatprep.subr.mxu0 0.0
    %994 = vmatpush1.xpose.msra.mxu0 0.0
    %995 = vmatprep.subr.mxu0 0.0
    %996 = vmatpush1.xpose.msra.mxu0 0.0
    %997 = vmatprep.subr.mxu0 0.0
    %998 = vmatpush1.xpose.msra.mxu0 0.0
    %999 = vmatprep.subr.mxu0 0.0
    %1000 = vmatpush1.xpose.msra.mxu0 0.0
    %1001 = vmatprep.subr.mxu0 0.0
    %1002 = vmatpush1.xpose.msra.mxu0 0.0
    %1003 = vmatprep.subr.mxu0 0.0
    %1004 = vmatpush1.xpose.msra.mxu0 0.0
    %1005 = vmatprep.subr.mxu0 0.0
    %1006 = vmatpush1.xpose.msra.mxu0 0.0
    %1007 = vmatprep.subr.mxu0 0.0
    %1008 = vmatpush1.xpose.msra.mxu0 0.0
    %1009 = vmatprep.subr.mxu0 0.0
    %1010 = vmatpush1.xpose.msra.mxu0 0.0
    %1011 = vmatprep.subr.mxu0 0.0
    %1012 = vmatpush1.xpose.msra.mxu0 0.0
    %1013 = vmatprep.subr.mxu0 0.0
    %1014 = vmatpush1.xpose.msra.mxu0 0.0
    %1015 = vmatprep.subr.mxu0 0.0
    %1016 = vmatpush1.xpose.msra.mxu0 0.0
    %1017 = vmatprep.subr.mxu0 0.0
    %1018 = vmatpush1.xpose.msra.mxu0 0.0
    %1019 = vmatprep.subr.mxu0 0.0
    %1020 = vmatpush1.xpose.msra.mxu0 0.0
    %1021 = vmatprep.subr.mxu0 0.0
    %1022 = vmatpush1.xpose.msra.mxu0 0.0
    %1023 = vmatprep.subr.mxu0 0.0
    %1024 = vmatpush1.xpose.msra.mxu0 0.0
    %1025 = vmatprep.subr.mxu0 0.0
    %1026 = vmatpush1.xpose.msra.mxu0 0.0
    %1027 = vmatprep.subr.mxu0 0.0
    %1028 = vmatpush1.xpose.msra.mxu0 0.0
    %1029 = vmatprep.subr.mxu0 0.0
    %1030 = vmatpush1.xpose.msra.mxu0 0.0
    %1031 = vmatprep.subr.mxu0 0.0
    %1032 = vmatpush1.xpose.msra.mxu0 0.0
    %1033 = vmatprep.subr.mxu0 0.0
    %1034 = vmatpush1.xpose.msra.mxu0 0.0
    %1035 = vmatprep.subr.mxu0 0.0
    %1036 = vmatpush1.xpose.msra.mxu0 0.0
    %1037 = vmatprep.subr.mxu0 0.0
    %1038 = vmatpush1.xpose.msra.mxu0 0.0
    %1039 = vmatprep.subr.mxu0 0.0
    %1040 = vmatpush1.xpose.msra.mxu0 0.0
    %1041 = vmatprep.subr.mxu0 0.0
    %1042 = vmatpush1.xpose.msra.mxu0 0.0
    %1043 = vmatprep.mubr.f32.mxu0 0.0
    %1044 = vmatmul.mubr.f32.gmra.mrb[0].mxu0 %v962
    %v1045 = vpop.f32.mrb[0].mxu0
    %v1046 = vadd.f32 0.0, %v1045
    %v1047 = vpop.f32.mrb[0].mxu0
    %1048 = vmatprep.mubr.f32.mxu0 0.0
    %1049 = vmatmul.mubr.f32.gmra.mrb[0].mxu0 %v965
    %v1050 = vpop.f32.mrb[0].mxu0
    %v1051 = vadd.f32 0.0, %v1050
    %v1052 = vpop.f32.mrb[0].mxu0
    %1053 = vdwg.mxu0
    %v1055 = vsel %vm619, %v959, 0
    %v1058 = vsel %vm619, %v1046, 0
    %v1061 = vsel %vm619, %v1051, 0
    %1063 = vmatprep.subr.mxu0 0.0
    %1064 = vmatpush1.xpose.msra.mxu0 %v1058
    %1065 = vmatprep.subr.mxu0 0.0
    %1066 = vmatpush1.xpose.msra.mxu0 %v1061
    %1067 = vmatprep.subr.mxu0 0.0
    %1068 = vmatpush1.xpose.msra.mxu0 0.0
    %1069 = vmatprep.subr.mxu0 0.0
    %1070 = vmatpush1.xpose.msra.mxu0 0.0
    %1071 = vmatprep.subr.mxu0 0.0
    %1072 = vmatpush1.xpose.msra.mxu0 0.0
    %1073 = vmatprep.subr.mxu0 0.0
    %1074 = vmatpush1.xpose.msra.mxu0 0.0
    %1075 = vmatprep.subr.mxu0 0.0
    %1076 = vmatpush1.xpose.msra.mxu0 0.0
    %1077 = vmatprep.subr.mxu0 0.0
    %1078 = vmatpush1.xpose.msra.mxu0 0.0
    %1079 = vmatprep.subr.mxu0 0.0
    %1080 = vmatpush1.xpose.msra.mxu0 0.0
    %1081 = vmatprep.subr.mxu0 0.0
    %1082 = vmatpush1.xpose.msra.mxu0 0.0
    %1083 = vmatprep.subr.mxu0 0.0
    %1084 = vmatpush1.xpose.msra.mxu0 0.0
    %1085 = vmatprep.subr.mxu0 0.0
    %1086 = vmatpush1.xpose.msra.mxu0 0.0
    %1087 = vmatprep.subr.mxu0 0.0
    %1088 = vmatpush1.xpose.msra.mxu0 0.0
    %1089 = vmatprep.subr.mxu0 0.0
    %1090 = vmatpush1.xpose.msra.mxu0 0.0
    %1091 = vmatprep.subr.mxu0 0.0
    %1092 = vmatpush1.xpose.msra.mxu0 0.0
    %1093 = vmatprep.subr.mxu0 0.0
    %1094 = vmatpush1.xpose.msra.mxu0 0.0
    %1095 = vmatprep.subr.mxu0 0.0
    %1096 = vmatpush1.xpose.msra.mxu0 0.0
    %1097 = vmatprep.subr.mxu0 0.0
    %1098 = vmatpush1.xpose.msra.mxu0 0.0
    %1099 = vmatprep.subr.mxu0 0.0
    %1100 = vmatpush1.xpose.msra.mxu0 0.0
    %1101 = vmatprep.subr.mxu0 0.0
    %1102 = vmatpush1.xpose.msra.mxu0 0.0
    %1103 = vmatprep.subr.mxu0 0.0
    %1104 = vmatpush1.xpose.msra.mxu0 0.0
    %1105 = vmatprep.subr.mxu0 0.0
    %1106 = vmatpush1.xpose.msra.mxu0 0.0
    %1107 = vmatprep.subr.mxu0 0.0
    %1108 = vmatpush1.xpose.msra.mxu0 0.0
    %1109 = vmatprep.subr.mxu0 0.0
    %1110 = vmatpush1.xpose.msra.mxu0 0.0
    %1111 = vmatprep.subr.mxu0 0.0
    %1112 = vmatpush1.xpose.msra.mxu0 0.0
    %1113 = vmatprep.subr.mxu0 0.0
    %1114 = vmatpush1.xpose.msra.mxu0 0.0
    %1115 = vmatprep.subr.mxu0 0.0
    %1116 = vmatpush1.xpose.msra.mxu0 0.0
    %1117 = vmatprep.subr.mxu0 0.0
    %1118 = vmatpush1.xpose.msra.mxu0 0.0
    %1119 = vmatprep.subr.mxu0 0.0
    %1120 = vmatpush1.xpose.msra.mxu0 0.0
    %1121 = vmatprep.subr.mxu0 0.0
    %1122 = vmatpush1.xpose.msra.mxu0 0.0
    %1123 = vmatprep.subr.mxu0 0.0
    %1124 = vmatpush1.xpose.msra.mxu0 0.0
    %1125 = vmatprep.subr.mxu0 0.0
    %1126 = vmatpush1.xpose.msra.mxu0 0.0
    %1127 = vmatprep.mubr.f32.mxu0 0.0
    %1128 = vmatmul.mubr.f32.gmra.mrb[0].mxu0 %v1055
    %v1129 = vpop.f32.mrb[0].mxu0
    %v1130 = vadd.f32 0.0, %v1129
    %v1131 = vpop.f32.mrb[0].mxu0
    %1132 = vdwg.mxu0
    %v1133 = vlaneseq
    %v1134 = vshrl.u32 %v1133, 7
    %v1135 = vsub.s32 0, %v1134
    %v1136 = vrot.slane %v960, %v1135
    %v1137 = vmul.f32 %v1046, %v1136
    %v1138 = vmul.f32 %v1051, %v1136
    %v1139 = vsel %vm619, %v1137, 0.0
    %1140 = vadd.xlane.f32.xlu0 %v1139
    %v1141 = vpop.xlane.xlu0 %1140
    %v1142 = vsel %vm619, %v1138, 0.0
    %1143 = vadd.xlane.f32.xlu0 %v1142
    %v1144 = vpop.xlane.xlu0 %1143
    %v1145 = vlaneseq
    %v1146 = vshrl.u32 %v1145, 7
    %v1147 = vsub.s32 0, %v1146
    %v1148 = vrot.slane %v1130, %v1147
    %v1149 = vadd.f32 %v1141, %v1148
    %v1150 = vadd.f32 %v1144, %v1148
    %vm1151 = vcmp.gt.f32.partialorder %v1149, 0.0
    %vm1152 = vcmp.gt.f32.partialorder %v1150, 0.0
    %v1153 = vmul.f32 %v1149, 0.01
    %v1154 = vmul.f32 %v1150, 0.01
    %v1155 = vsel %vm1151, %v1149, %v1153
    %v1156 = vsel %vm1152, %v1150, %v1154
    %v1157 = vadd.f32 %v1155, %v63
    %v1158 = vadd.f32 %v1156, %v64
    %v1159 = vsel %vm77, %v1157, -inf
    %1160 = vmax.xlane.f32.xlu0 %v1159
    %v1161 = vpop.xlane.xlu0 %1160
    %v1162 = vsel %vm77, %v1158, -inf
    %1163 = vmax.xlane.f32.xlu0 %v1162
    %v1164 = vpop.xlane.xlu0 %1163
    %v1165 = vsub.f32 %v1157, %v1161
    %v1166 = vsub.f32 %v1158, %v1164
    %v1167 = vmul.f32 %v1165, 1.442695
    %v1168 = vpow.pop %v1167
    %v1169 = vmul.f32 %v1166, 1.442695
    %v1170 = vpow.pop %v1169
    %v1171 = vsel %vm77, %v1168, 0.0
    %1172 = vadd.xlane.f32.xlu0 %v1171
    %v1173 = vpop.xlane.xlu0 %1172
    %v1174 = vsel %vm77, %v1170, 0.0
    %1175 = vadd.xlane.f32.xlu0 %v1174
    %v1176 = vpop.xlane.xlu0 %1175
    %v1177 = vrcp.pop %v1173
    %v1178 = vrcp.pop %v1176
    %v1179 = vmul.f32 %v1173, %v1177
    %v1180 = vmul.f32 %v1176, %v1178
    %v1181 = vsub.f32 2.0, %v1179
    %v1182 = vsub.f32 2.0, %v1180
    %v1183 = vmul.f32 %v1177, %v1181
    %v1184 = vmul.f32 %v1178, %v1182
    %v1185 = vmul.f32 %v1168, %v1183
    %v1186 = vmul.f32 %v1170, %v1184
    %v1188 = vsel %vm77, %v1185, 0
    %v1191 = vsel %vm77, %v1186, 0
    %1193 = vmatprep.subr.mxu0 0.0
    %1194 = vmatpush1.msra.mxu0 %v1046
    %1195 = vmatprep.subr.mxu0 0.0
    %1196 = vmatpush1.msra.mxu0 %v1051
    %1197 = vmatprep.subr.mxu0 0.0
    %1198 = vmatpush1.msra.mxu0 0.0
    %1199 = vmatprep.subr.mxu0 0.0
    %1200 = vmatpush1.msra.mxu0 0.0
    %1201 = vmatprep.subr.mxu0 0.0
    %1202 = vmatpush1.msra.mxu0 0.0
    %1203 = vmatprep.subr.mxu0 0.0
    %1204 = vmatpush1.msra.mxu0 0.0
    %1205 = vmatprep.subr.mxu0 0.0
    %1206 = vmatpush1.msra.mxu0 0.0
    %1207 = vmatprep.subr.mxu0 0.0
    %1208 = vmatpush1.msra.mxu0 0.0
    %1209 = vmatprep.subr.mxu0 0.0
    %1210 = vmatpush1.msra.mxu0 0.0
    %1211 = vmatprep.subr.mxu0 0.0
    %1212 = vmatpush1.msra.mxu0 0.0
    %1213 = vmatprep.subr.mxu0 0.0
    %1214 = vmatpush1.msra.mxu0 0.0
    %1215 = vmatprep.subr.mxu0 0.0
    %1216 = vmatpush1.msra.mxu0 0.0
    %1217 = vmatprep.subr.mxu0 0.0
    %1218 = vmatpush1.msra.mxu0 0.0
    %1219 = vmatprep.subr.mxu0 0.0
    %1220 = vmatpush1.msra.mxu0 0.0
    %1221 = vmatprep.subr.mxu0 0.0
    %1222 = vmatpush1.msra.mxu0 0.0
    %1223 = vmatprep.subr.mxu0 0.0
    %1224 = vmatpush1.msra.mxu0 0.0
    %1225 = vmatprep.subr.mxu0 0.0
    %1226 = vmatpush1.msra.mxu0 0.0
    %1227 = vmatprep.subr.mxu0 0.0
    %1228 = vmatpush1.msra.mxu0 0.0
    %1229 = vmatprep.subr.mxu0 0.0
    %1230 = vmatpush1.msra.mxu0 0.0
    %1231 = vmatprep.subr.mxu0 0.0
    %1232 = vmatpush1.msra.mxu0 0.0
    %1233 = vmatprep.subr.mxu0 0.0
    %1234 = vmatpush1.msra.mxu0 0.0
    %1235 = vmatprep.subr.mxu0 0.0
    %1236 = vmatpush1.msra.mxu0 0.0
    %1237 = vmatprep.subr.mxu0 0.0
    %1238 = vmatpush1.msra.mxu0 0.0
    %1239 = vmatprep.subr.mxu0 0.0
    %1240 = vmatpush1.msra.mxu0 0.0
    %1241 = vmatprep.subr.mxu0 0.0
    %1242 = vmatpush1.msra.mxu0 0.0
    %1243 = vmatprep.subr.mxu0 0.0
    %1244 = vmatpush1.msra.mxu0 0.0
    %1245 = vmatprep.subr.mxu0 0.0
    %1246 = vmatpush1.msra.mxu0 0.0
    %1247 = vmatprep.subr.mxu0 0.0
    %1248 = vmatpush1.msra.mxu0 0.0
    %1249 = vmatprep.subr.mxu0 0.0
    %1250 = vmatpush1.msra.mxu0 0.0
    %1251 = vmatprep.subr.mxu0 0.0
    %1252 = vmatpush1.msra.mxu0 0.0
    %1253 = vmatprep.subr.mxu0 0.0
    %1254 = vmatpush1.msra.mxu0 0.0
    %1255 = vmatprep.subr.mxu0 0.0
    %1256 = vmatpush1.msra.mxu0 0.0
    %1257 = vmatprep.mubr.f32.mxu0 0.0
    %1258 = vmatmul.mubr.f32.gmra.mrb[0].mxu0 %v1188
    %v1259 = vpop.f32.mrb[0].mxu0
    %v1260 = vadd.f32 0.0, %v1259
    %v1261 = vpop.f32.mrb[0].mxu0
    %1262 = vmatprep.mubr.f32.mxu0 0.0
    %1263 = vmatmul.mubr.f32.gmra.mrb[0].mxu0 %v1191
    %v1264 = vpop.f32.mrb[0].mxu0
    %v1265 = vadd.f32 0.0, %v1264
    %v1266 = vpop.f32.mrb[0].mxu0
    %1267 = vdwg.mxu0
    %v1268 = vmax.f32 %v1260, 0.0
    %v1269 = vmax.f32 %v1265, 0.0
    %v1270 = vld [vmem:[#allocation6 + $0xd0] sm:$0xff]
    %v1271 = vld [vmem:[#allocation6 + $0xd8] sm:$0x1]
    %v1272 = vld [vmem:[#allocation6 + $0xe0] sm:$0x1]
    %v1274 = vsel %vm619, %v1268, 0
    %v1277 = vsel %vm619, %v1269, 0
    %v1280 = vsel %vm619, %v1270, 0
    %1282 = vmatprep.subr.mxu0 0.0
    %1283 = vmatpush1.xpose.msra.mxu0 %v1280
    %1284 = vmatprep.subr.mxu0 0.0
    %1285 = vmatpush1.xpose.msra.mxu0 0.0
    %1286 = vmatprep.subr.mxu0 0.0
    %1287 = vmatpush1.xpose.msra.mxu0 0.0
    %1288 = vmatprep.subr.mxu0 0.0
    %1289 = vmatpush1.xpose.msra.mxu0 0.0
    %1290 = vmatprep.subr.mxu0 0.0
    %1291 = vmatpush1.xpose.msra.mxu0 0.0
    %1292 = vmatprep.subr.mxu0 0.0
    %1293 = vmatpush1.xpose.msra.mxu0 0.0
    %1294 = vmatprep.subr.mxu0 0.0
    %1295 = vmatpush1.xpose.msra.mxu0 0.0
    %1296 = vmatprep.subr.mxu0 0.0
    %1297 = vmatpush1.xpose.msra.mxu0 0.0
    %1298 = vmatprep.subr.mxu0 0.0
    %1299 = vmatpush1.xpose.msra.mxu0 0.0
    %1300 = vmatprep.subr.mxu0 0.0
    %1301 = vmatpush1.xpose.msra.mxu0 0.0
    %1302 = vmatprep.subr.mxu0 0.0
    %1303 = vmatpush1.xpose.msra.mxu0 0.0
    %1304 = vmatprep.subr.mxu0 0.0
    %1305 = vmatpush1.xpose.msra.mxu0 0.0
    %1306 = vmatprep.subr.mxu0 0.0
    %1307 = vmatpush1.xpose.msra.mxu0 0.0
    %1308 = vmatprep.subr.mxu0 0.0
    %1309 = vmatpush1.xpose.msra.mxu0 0.0
    %1310 = vmatprep.subr.mxu0 0.0
    %1311 = vmatpush1.xpose.msra.mxu0 0.0
    %1312 = vmatprep.subr.mxu0 0.0
    %1313 = vmatpush1.xpose.msra.mxu0 0.0
    %1314 = vmatprep.subr.mxu0 0.0
    %1315 = vmatpush1.xpose.msra.mxu0 0.0
    %1316 = vmatprep.subr.mxu0 0.0
    %1317 = vmatpush1.xpose.msra.mxu0 0.0
    %1318 = vmatprep.subr.mxu0 0.0
    %1319 = vmatpush1.xpose.msra.mxu0 0.0
    %1320 = vmatprep.subr.mxu0 0.0
    %1321 = vmatpush1.xpose.msra.mxu0 0.0
    %1322 = vmatprep.subr.mxu0 0.0
    %1323 = vmatpush1.xpose.msra.mxu0 0.0
    %1324 = vmatprep.subr.mxu0 0.0
    %1325 = vmatpush1.xpose.msra.mxu0 0.0
    %1326 = vmatprep.subr.mxu0 0.0
    %1327 = vmatpush1.xpose.msra.mxu0 0.0
    %1328 = vmatprep.subr.mxu0 0.0
    %1329 = vmatpush1.xpose.msra.mxu0 0.0
    %1330 = vmatprep.subr.mxu0 0.0
    %1331 = vmatpush1.xpose.msra.mxu0 0.0
    %1332 = vmatprep.subr.mxu0 0.0
    %1333 = vmatpush1.xpose.msra.mxu0 0.0
    %1334 = vmatprep.subr.mxu0 0.0
    %1335 = vmatpush1.xpose.msra.mxu0 0.0
    %1336 = vmatprep.subr.mxu0 0.0
    %1337 = vmatpush1.xpose.msra.mxu0 0.0
    %1338 = vmatprep.subr.mxu0 0.0
    %1339 = vmatpush1.xpose.msra.mxu0 0.0
    %1340 = vmatprep.subr.mxu0 0.0
    %1341 = vmatpush1.xpose.msra.mxu0 0.0
    %1342 = vmatprep.subr.mxu0 0.0
    %1343 = vmatpush1.xpose.msra.mxu0 0.0
    %1344 = vmatprep.subr.mxu0 0.0
    %1345 = vmatpush1.xpose.msra.mxu0 0.0
    %1346 = vmatprep.mubr.f32.mxu0 0.0
    %1347 = vmatmul.mubr.f32.gmra.mrb[0].mxu0 %v1274
    %v1348 = vpop.f32.mrb[0].mxu0
    %v1349 = vadd.f32 0.0, %v1348
    %v1350 = vpop.f32.mrb[0].mxu0
    %1351 = vmatprep.mubr.f32.mxu0 0.0
    %1352 = vmatmul.mubr.f32.gmra.mrb[0].mxu0 %v1277
    %v1353 = vpop.f32.mrb[0].mxu0
    %v1354 = vadd.f32 0.0, %v1353
    %v1355 = vpop.f32.mrb[0].mxu0
    %1356 = vdwg.mxu0
    %vm1357 = vcmask 64512
    %v1359 = vsel %vm1357, %v1271, 0
    %v1362 = vsel %vm1357, %v1349, 0
    %v1365 = vsel %vm1357, %v1354, 0
    %1367 = vmatprep.subr.mxu0 0.0
    %1368 = vmatpush1.xpose.msra.mxu0 %v1362
    %1369 = vmatprep.subr.mxu0 0.0
    %1370 = vmatpush1.xpose.msra.mxu0 %v1365
    %1371 = vmatprep.subr.mxu0 0.0
    %1372 = vmatpush1.xpose.msra.mxu0 0.0
    %1373 = vmatprep.subr.mxu0 0.0
    %1374 = vmatpush1.xpose.msra.mxu0 0.0
    %1375 = vmatprep.subr.mxu0 0.0
    %1376 = vmatpush1.xpose.msra.mxu0 0.0
    %1377 = vmatprep.subr.mxu0 0.0
    %1378 = vmatpush1.xpose.msra.mxu0 0.0
    %1379 = vmatprep.subr.mxu0 0.0
    %1380 = vmatpush1.xpose.msra.mxu0 0.0
    %1381 = vmatprep.subr.mxu0 0.0
    %1382 = vmatpush1.xpose.msra.mxu0 0.0
    %1383 = vmatprep.subr.mxu0 0.0
    %1384 = vmatpush1.xpose.msra.mxu0 0.0
    %1385 = vmatprep.subr.mxu0 0.0
    %1386 = vmatpush1.xpose.msra.mxu0 0.0
    %1387 = vmatprep.subr.mxu0 0.0
    %1388 = vmatpush1.xpose.msra.mxu0 0.0
    %1389 = vmatprep.subr.mxu0 0.0
    %1390 = vmatpush1.xpose.msra.mxu0 0.0
    %1391 = vmatprep.subr.mxu0 0.0
    %1392 = vmatpush1.xpose.msra.mxu0 0.0
    %1393 = vmatprep.subr.mxu0 0.0
    %1394 = vmatpush1.xpose.msra.mxu0 0.0
    %1395 = vmatprep.subr.mxu0 0.0
    %1396 = vmatpush1.xpose.msra.mxu0 0.0
    %1397 = vmatprep.subr.mxu0 0.0
    %1398 = vmatpush1.xpose.msra.mxu0 0.0
    %1399 = vmatprep.subr.mxu0 0.0
    %1400 = vmatpush1.xpose.msra.mxu0 0.0
    %1401 = vmatprep.subr.mxu0 0.0
    %1402 = vmatpush1.xpose.msra.mxu0 0.0
    %1403 = vmatprep.subr.mxu0 0.0
    %1404 = vmatpush1.xpose.msra.mxu0 0.0
    %1405 = vmatprep.subr.mxu0 0.0
    %1406 = vmatpush1.xpose.msra.mxu0 0.0
    %1407 = vmatprep.subr.mxu0 0.0
    %1408 = vmatpush1.xpose.msra.mxu0 0.0
    %1409 = vmatprep.subr.mxu0 0.0
    %1410 = vmatpush1.xpose.msra.mxu0 0.0
    %1411 = vmatprep.subr.mxu0 0.0
    %1412 = vmatpush1.xpose.msra.mxu0 0.0
    %1413 = vmatprep.subr.mxu0 0.0
    %1414 = vmatpush1.xpose.msra.mxu0 0.0
    %1415 = vmatprep.subr.mxu0 0.0
    %1416 = vmatpush1.xpose.msra.mxu0 0.0
    %1417 = vmatprep.subr.mxu0 0.0
    %1418 = vmatpush1.xpose.msra.mxu0 0.0
    %1419 = vmatprep.subr.mxu0 0.0
    %1420 = vmatpush1.xpose.msra.mxu0 0.0
    %1421 = vmatprep.subr.mxu0 0.0
    %1422 = vmatpush1.xpose.msra.mxu0 0.0
    %1423 = vmatprep.subr.mxu0 0.0
    %1424 = vmatpush1.xpose.msra.mxu0 0.0
    %1425 = vmatprep.subr.mxu0 0.0
    %1426 = vmatpush1.xpose.msra.mxu0 0.0
    %1427 = vmatprep.subr.mxu0 0.0
    %1428 = vmatpush1.xpose.msra.mxu0 0.0
    %1429 = vmatprep.subr.mxu0 0.0
    %1430 = vmatpush1.xpose.msra.mxu0 0.0
    %1431 = vmatprep.mubr.f32.mxu0 0.0
    %1432 = vmatmul.mubr.f32.gmra.mrb[0].mxu0 %v1359
    %v1433 = vpop.f32.mrb[0].mxu0
    %v1434 = vadd.f32 0.0, %v1433
    %v1435 = vpop.f32.mrb[0].mxu0
    %1436 = vdwg.mxu0
    %v1437 = vlaneseq
    %v1438 = vshrl.u32 %v1437, 7
    %v1439 = vsub.s32 0, %v1438
    %v1440 = vrot.slane %v1272, %v1439
    %v1441 = vmul.f32 %v1349, %v1440
    %v1442 = vmul.f32 %v1354, %v1440
    %v1443 = vsel %vm1357, %v1441, 0.0
    %1444 = vadd.xlane.f32.xlu0 %v1443
    %v1445 = vpop.xlane.xlu0 %1444
    %v1446 = vsel %vm1357, %v1442, 0.0
    %1447 = vadd.xlane.f32.xlu0 %v1446
    %v1448 = vpop.xlane.xlu0 %1447
    %v1449 = vlaneseq
    %v1450 = vshrl.u32 %v1449, 7
    %v1451 = vsub.s32 0, %v1450
    %v1452 = vrot.slane %v1434, %v1451
    %v1453 = vadd.f32 %v1445, %v1452
    %v1454 = vadd.f32 %v1448, %v1452
    %vm1455 = vcmp.gt.f32.partialorder %v1453, 0.0
    %vm1456 = vcmp.gt.f32.partialorder %v1454, 0.0
    %v1457 = vmul.f32 %v1453, 0.01
    %v1458 = vmul.f32 %v1454, 0.01
    %v1459 = vsel %vm1455, %v1453, %v1457
    %v1460 = vsel %vm1456, %v1454, %v1458
    %v1461 = vadd.f32 %v1459, %v63
    %v1462 = vadd.f32 %v1460, %v64
    %v1463 = vsel %vm77, %v1461, -inf
    %1464 = vmax.xlane.f32.xlu0 %v1463
    %v1465 = vpop.xlane.xlu0 %1464
    %v1466 = vsel %vm77, %v1462, -inf
    %1467 = vmax.xlane.f32.xlu0 %v1466
    %v1468 = vpop.xlane.xlu0 %1467
    %v1469 = vsub.f32 %v1461, %v1465
    %v1470 = vsub.f32 %v1462, %v1468
    %v1471 = vmul.f32 %v1469, 1.442695
    %v1472 = vpow.pop %v1471
    %v1473 = vmul.f32 %v1470, 1.442695
    %v1474 = vpow.pop %v1473
    %v1475 = vsel %vm77, %v1472, 0.0
    %1476 = vadd.xlane.f32.xlu0 %v1475
    %v1477 = vpop.xlane.xlu0 %1476
    %v1478 = vsel %vm77, %v1474, 0.0
    %1479 = vadd.xlane.f32.xlu0 %v1478
    %v1480 = vpop.xlane.xlu0 %1479
    %v1481 = vrcp.pop %v1477
    %v1482 = vrcp.pop %v1480
    %v1483 = vmul.f32 %v1477, %v1481
    %v1484 = vmul.f32 %v1480, %v1482
    %v1485 = vsub.f32 2.0, %v1483
    %v1486 = vsub.f32 2.0, %v1484
    %v1487 = vmul.f32 %v1481, %v1485
    %v1488 = vmul.f32 %v1482, %v1486
    %v1489 = vmul.f32 %v1472, %v1487
    %v1490 = vmul.f32 %v1474, %v1488
    %v1492 = vsel %vm77, %v1489, 0
    %v1495 = vsel %vm77, %v1490, 0
    %1497 = vmatprep.subr.mxu0 0.0
    %1498 = vmatpush1.msra.mxu0 %v1349
    %1499 = vmatprep.subr.mxu0 0.0
    %1500 = vmatpush1.msra.mxu0 %v1354
    %1501 = vmatprep.subr.mxu0 0.0
    %1502 = vmatpush1.msra.mxu0 0.0
    %1503 = vmatprep.subr.mxu0 0.0
    %1504 = vmatpush1.msra.mxu0 0.0
    %1505 = vmatprep.subr.mxu0 0.0
    %1506 = vmatpush1.msra.mxu0 0.0
    %1507 = vmatprep.subr.mxu0 0.0
    %1508 = vmatpush1.msra.mxu0 0.0
    %1509 = vmatprep.subr.mxu0 0.0
    %1510 = vmatpush1.msra.mxu0 0.0
    %1511 = vmatprep.subr.mxu0 0.0
    %1512 = vmatpush1.msra.mxu0 0.0
    %1513 = vmatprep.subr.mxu0 0.0
    %1514 = vmatpush1.msra.mxu0 0.0
    %1515 = vmatprep.subr.mxu0 0.0
    %1516 = vmatpush1.msra.mxu0 0.0
    %1517 = vmatprep.subr.mxu0 0.0
    %1518 = vmatpush1.msra.mxu0 0.0
    %1519 = vmatprep.subr.mxu0 0.0
    %1520 = vmatpush1.msra.mxu0 0.0
    %1521 = vmatprep.subr.mxu0 0.0
    %1522 = vmatpush1.msra.mxu0 0.0
    %1523 = vmatprep.subr.mxu0 0.0
    %1524 = vmatpush1.msra.mxu0 0.0
    %1525 = vmatprep.subr.mxu0 0.0
    %1526 = vmatpush1.msra.mxu0 0.0
    %1527 = vmatprep.subr.mxu0 0.0
    %1528 = vmatpush1.msra.mxu0 0.0
    %1529 = vmatprep.subr.mxu0 0.0
    %1530 = vmatpush1.msra.mxu0 0.0
    %1531 = vmatprep.subr.mxu0 0.0
    %1532 = vmatpush1.msra.mxu0 0.0
    %1533 = vmatprep.subr.mxu0 0.0
    %1534 = vmatpush1.msra.mxu0 0.0
    %1535 = vmatprep.subr.mxu0 0.0
    %1536 = vmatpush1.msra.mxu0 0.0
    %1537 = vmatprep.subr.mxu0 0.0
    %1538 = vmatpush1.msra.mxu0 0.0
    %1539 = vmatprep.subr.mxu0 0.0
    %1540 = vmatpush1.msra.mxu0 0.0
    %1541 = vmatprep.subr.mxu0 0.0
    %1542 = vmatpush1.msra.mxu0 0.0
    %1543 = vmatprep.subr.mxu0 0.0
    %1544 = vmatpush1.msra.mxu0 0.0
    %1545 = vmatprep.subr.mxu0 0.0
    %1546 = vmatpush1.msra.mxu0 0.0
    %1547 = vmatprep.subr.mxu0 0.0
    %1548 = vmatpush1.msra.mxu0 0.0
    %1549 = vmatprep.subr.mxu0 0.0
    %1550 = vmatpush1.msra.mxu0 0.0
    %1551 = vmatprep.subr.mxu0 0.0
    %1552 = vmatpush1.msra.mxu0 0.0
    %1553 = vmatprep.subr.mxu0 0.0
    %1554 = vmatpush1.msra.mxu0 0.0
    %1555 = vmatprep.subr.mxu0 0.0
    %1556 = vmatpush1.msra.mxu0 0.0
    %1557 = vmatprep.subr.mxu0 0.0
    %1558 = vmatpush1.msra.mxu0 0.0
    %1559 = vmatprep.subr.mxu0 0.0
    %1560 = vmatpush1.msra.mxu0 0.0
    %1561 = vmatprep.mubr.f32.mxu0 0.0
    %1562 = vmatmul.mubr.f32.gmra.mrb[0].mxu0 %v1492
    %v1563 = vpop.f32.mrb[0].mxu0
    %v1564 = vadd.f32 0.0, %v1563
    %v1565 = vpop.f32.mrb[0].mxu0
    %1566 = vmatprep.mubr.f32.mxu0 0.0
    %1567 = vmatmul.mubr.f32.gmra.mrb[0].mxu0 %v1495
    %v1568 = vpop.f32.mrb[0].mxu0
    %v1569 = vadd.f32 0.0, %v1568
    %v1570 = vpop.f32.mrb[0].mxu0
    %1571 = vdwg.mxu0
    %v1572 = vmax.f32 %v1564, 0.0
    %v1573 = vmax.f32 %v1569, 0.0
    %v1574 = vld [vmem:[#allocation6 + $0xe8] sm:$0xff]
    %v1575 = vld [vmem:[#allocation6 + $0xf0] sm:$0xff]
    %v1576 = vld [vmem:[#allocation6 + $0xf8] sm:$0xff]
    %v1577 = vld [vmem:[#allocation6 + $0x100] sm:$0xff]
    %v1578 = vld [vmem:[#allocation6 + $0x108] sm:$0xff]
    %v1579 = vld [vmem:[#allocation6 + $0x110] sm:$0xff]
    %v1580 = vld [vmem:[#allocation6 + $0x118] sm:$0xff]
    %v1581 = vld [vmem:[#allocation6 + $0x120] sm:$0xff]
    %v1582 = vld [vmem:[#allocation6 + $0x128] sm:$0xff]
    %v1583 = vld [vmem:[#allocation6 + $0x130] sm:$0xff]
    %v1584 = vld [vmem:[#allocation6 + $0x138] sm:$0xff]
    %v1585 = vld [vmem:[#allocation6 + $0x140] sm:$0xff]
    %v1586 = vld [vmem:[#allocation6 + $0x148] sm:$0xff]
    %v1587 = vld [vmem:[#allocation6 + $0x150] sm:$0xff]
    %v1588 = vld [vmem:[#allocation6 + $0x158] sm:$0xff]
    %v1589 = vld [vmem:[#allocation6 + $0x160] sm:$0xff]
    %v1590 = vld [vmem:[#allocation6 + $0x168] sm:$0x1]
    %v1591 = vld [vmem:[#allocation6 + $0x170] sm:$0x1]
    %v1593 = vsel %vm1357, %v1572, 0
    %v1596 = vsel %vm1357, %v1573, 0
    %v1599 = vsel %vm1357, %v1574, 0
    %v1602 = vsel %vm1357, %v1575, 0
    %v1605 = vsel %vm1357, %v1576, 0
    %v1608 = vsel %vm1357, %v1577, 0
    %v1611 = vsel %vm1357, %v1578, 0
    %v1614 = vsel %vm1357, %v1579, 0
    %v1617 = vsel %vm1357, %v1580, 0
    %v1620 = vsel %vm1357, %v1581, 0
    %v1623 = vsel %vm1357, %v1582, 0
    %v1626 = vsel %vm1357, %v1583, 0
    %v1629 = vsel %vm1357, %v1584, 0
    %v1632 = vsel %vm1357, %v1585, 0
    %v1635 = vsel %vm1357, %v1586, 0
    %v1638 = vsel %vm1357, %v1587, 0
    %v1641 = vsel %vm1357, %v1588, 0
    %v1644 = vsel %vm1357, %v1589, 0
    %1646 = vmatprep.subr.mxu0 0.0
    %1647 = vmatpush1.xpose.msra.mxu0 %v1599
    %1648 = vmatprep.subr.mxu0 0.0
    %1649 = vmatpush1.xpose.msra.mxu0 %v1602
    %1650 = vmatprep.subr.mxu0 0.0
    %1651 = vmatpush1.xpose.msra.mxu0 %v1605
    %1652 = vmatprep.subr.mxu0 0.0
    %1653 = vmatpush1.xpose.msra.mxu0 %v1608
    %1654 = vmatprep.subr.mxu0 0.0
    %1655 = vmatpush1.xpose.msra.mxu0 %v1611
    %1656 = vmatprep.subr.mxu0 0.0
    %1657 = vmatpush1.xpose.msra.mxu0 %v1614
    %1658 = vmatprep.subr.mxu0 0.0
    %1659 = vmatpush1.xpose.msra.mxu0 %v1617
    %1660 = vmatprep.subr.mxu0 0.0
    %1661 = vmatpush1.xpose.msra.mxu0 %v1620
    %1662 = vmatprep.subr.mxu0 0.0
    %1663 = vmatpush1.xpose.msra.mxu0 %v1623
    %1664 = vmatprep.subr.mxu0 0.0
    %1665 = vmatpush1.xpose.msra.mxu0 %v1626
    %1666 = vmatprep.subr.mxu0 0.0
    %1667 = vmatpush1.xpose.msra.mxu0 %v1629
    %1668 = vmatprep.subr.mxu0 0.0
    %1669 = vmatpush1.xpose.msra.mxu0 %v1632
    %1670 = vmatprep.subr.mxu0 0.0
    %1671 = vmatpush1.xpose.msra.mxu0 %v1635
    %1672 = vmatprep.subr.mxu0 0.0
    %1673 = vmatpush1.xpose.msra.mxu0 %v1638
    %1674 = vmatprep.subr.mxu0 0.0
    %1675 = vmatpush1.xpose.msra.mxu0 %v1641
    %1676 = vmatprep.subr.mxu0 0.0
    %1677 = vmatpush1.xpose.msra.mxu0 %v1644
    %1678 = vmatprep.subr.mxu0 0.0
    %1679 = vmatpush1.xpose.msra.mxu0 0.0
    %1680 = vmatprep.subr.mxu0 0.0
    %1681 = vmatpush1.xpose.msra.mxu0 0.0
    %1682 = vmatprep.subr.mxu0 0.0
    %1683 = vmatpush1.xpose.msra.mxu0 0.0
    %1684 = vmatprep.subr.mxu0 0.0
    %1685 = vmatpush1.xpose.msra.mxu0 0.0
    %1686 = vmatprep.subr.mxu0 0.0
    %1687 = vmatpush1.xpose.msra.mxu0 0.0
    %1688 = vmatprep.subr.mxu0 0.0
    %1689 = vmatpush1.xpose.msra.mxu0 0.0
    %1690 = vmatprep.subr.mxu0 0.0
    %1691 = vmatpush1.xpose.msra.mxu0 0.0
    %1692 = vmatprep.subr.mxu0 0.0
    %1693 = vmatpush1.xpose.msra.mxu0 0.0
    %1694 = vmatprep.subr.mxu0 0.0
    %1695 = vmatpush1.xpose.msra.mxu0 0.0
    %1696 = vmatprep.subr.mxu0 0.0
    %1697 = vmatpush1.xpose.msra.mxu0 0.0
    %1698 = vmatprep.subr.mxu0 0.0
    %1699 = vmatpush1.xpose.msra.mxu0 0.0
    %1700 = vmatprep.subr.mxu0 0.0
    %1701 = vmatpush1.xpose.msra.mxu0 0.0
    %1702 = vmatprep.subr.mxu0 0.0
    %1703 = vmatpush1.xpose.msra.mxu0 0.0
    %1704 = vmatprep.subr.mxu0 0.0
    %1705 = vmatpush1.xpose.msra.mxu0 0.0
    %1706 = vmatprep.subr.mxu0 0.0
    %1707 = vmatpush1.xpose.msra.mxu0 0.0
    %1708 = vmatprep.subr.mxu0 0.0
    %1709 = vmatpush1.xpose.msra.mxu0 0.0
    %1710 = vmatprep.mubr.f32.mxu0 0.0
    %1711 = vmatmul.mubr.f32.gmra.mrb[0].mxu0 %v1593
    %v1712 = vpop.f32.mrb[0].mxu0
    %v1713 = vadd.f32 0.0, %v1712
    %v1714 = vpop.f32.mrb[0].mxu0
    %1715 = vmatprep.mubr.f32.mxu0 0.0
    %1716 = vmatmul.mubr.f32.gmra.mrb[0].mxu0 %v1596
    %v1717 = vpop.f32.mrb[0].mxu0
    %v1718 = vadd.f32 0.0, %v1717
    %v1719 = vpop.f32.mrb[0].mxu0
    %1720 = vdwg.mxu0
    %1721 = vmatprep.subr.mxu0 0.0
    %1722 = vmatpush1.xpose.msra.mxu0 %v1713
    %1723 = vmatprep.subr.mxu0 0.0
    %1724 = vmatpush1.xpose.msra.mxu0 %v1718
    %1725 = vmatprep.subr.mxu0 0.0
    %1726 = vmatpush1.xpose.msra.mxu0 0.0
    %1727 = vmatprep.subr.mxu0 0.0
    %1728 = vmatpush1.xpose.msra.mxu0 0.0
    %1729 = vmatprep.subr.mxu0 0.0
    %1730 = vmatpush1.xpose.msra.mxu0 0.0
    %1731 = vmatprep.subr.mxu0 0.0
    %1732 = vmatpush1.xpose.msra.mxu0 0.0
    %1733 = vmatprep.subr.mxu0 0.0
    %1734 = vmatpush1.xpose.msra.mxu0 0.0
    %1735 = vmatprep.subr.mxu0 0.0
    %1736 = vmatpush1.xpose.msra.mxu0 0.0
    %1737 = vmatprep.subr.mxu0 0.0
    %1738 = vmatpush1.xpose.msra.mxu0 0.0
    %1739 = vmatprep.subr.mxu0 0.0
    %1740 = vmatpush1.xpose.msra.mxu0 0.0
    %1741 = vmatprep.subr.mxu0 0.0
    %1742 = vmatpush1.xpose.msra.mxu0 0.0
    %1743 = vmatprep.subr.mxu0 0.0
    %1744 = vmatpush1.xpose.msra.mxu0 0.0
    %1745 = vmatprep.subr.mxu0 0.0
    %1746 = vmatpush1.xpose.msra.mxu0 0.0
    %1747 = vmatprep.subr.mxu0 0.0
    %1748 = vmatpush1.xpose.msra.mxu0 0.0
    %1749 = vmatprep.subr.mxu0 0.0
    %1750 = vmatpush1.xpose.msra.mxu0 0.0
    %1751 = vmatprep.subr.mxu0 0.0
    %1752 = vmatpush1.xpose.msra.mxu0 0.0
    %1753 = vmatprep.subr.mxu0 0.0
    %1754 = vmatpush1.xpose.msra.mxu0 0.0
    %1755 = vmatprep.subr.mxu0 0.0
    %1756 = vmatpush1.xpose.msra.mxu0 0.0
    %1757 = vmatprep.subr.mxu0 0.0
    %1758 = vmatpush1.xpose.msra.mxu0 0.0
    %1759 = vmatprep.subr.mxu0 0.0
    %1760 = vmatpush1.xpose.msra.mxu0 0.0
    %1761 = vmatprep.subr.mxu0 0.0
    %1762 = vmatpush1.xpose.msra.mxu0 0.0
    %1763 = vmatprep.subr.mxu0 0.0
    %1764 = vmatpush1.xpose.msra.mxu0 0.0
    %1765 = vmatprep.subr.mxu0 0.0
    %1766 = vmatpush1.xpose.msra.mxu0 0.0
    %1767 = vmatprep.subr.mxu0 0.0
    %1768 = vmatpush1.xpose.msra.mxu0 0.0
    %1769 = vmatprep.subr.mxu0 0.0
    %1770 = vmatpush1.xpose.msra.mxu0 0.0
    %1771 = vmatprep.subr.mxu0 0.0
    %1772 = vmatpush1.xpose.msra.mxu0 0.0
    %1773 = vmatprep.subr.mxu0 0.0
    %1774 = vmatpush1.xpose.msra.mxu0 0.0
    %1775 = vmatprep.subr.mxu0 0.0
    %1776 = vmatpush1.xpose.msra.mxu0 0.0
    %1777 = vmatprep.subr.mxu0 0.0
    %1778 = vmatpush1.xpose.msra.mxu0 0.0
    %1779 = vmatprep.subr.mxu0 0.0
    %1780 = vmatpush1.xpose.msra.mxu0 0.0
    %1781 = vmatprep.subr.mxu0 0.0
    %1782 = vmatpush1.xpose.msra.mxu0 0.0
    %1783 = vmatprep.subr.mxu0 0.0
    %1784 = vmatpush1.xpose.msra.mxu0 0.0
    %1785 = vmatprep.mubr.f32.mxu0 0.0
    %1786 = vmatmul.mubr.f32.gmra.mrb[0].mxu0 %v1590
    %v1787 = vpop.f32.mrb[0].mxu0
    %v1788 = vadd.f32 0.0, %v1787
    %v1789 = vpop.f32.mrb[0].mxu0
    %1790 = vdwg.mxu0
    %v1791 = vlaneseq
    %v1792 = vshrl.u32 %v1791, 7
    %v1793 = vsub.s32 0, %v1792
    %v1794 = vrot.slane %v1591, %v1793
    %v1795 = vmul.f32 %v1713, %v1794
    %v1796 = vmul.f32 %v1718, %v1794
    %1797 = vadd.xlane.f32.xlu0 %v1795
    %v1798 = vpop.xlane.xlu0 %1797
    %1799 = vadd.xlane.f32.xlu0 %v1796
    %v1800 = vpop.xlane.xlu0 %1799
    %v1801 = vlaneseq
    %v1802 = vshrl.u32 %v1801, 7
    %v1803 = vsub.s32 0, %v1802
    %v1804 = vrot.slane %v1788, %v1803
    %v1805 = vadd.f32 %v1798, %v1804
    %v1806 = vadd.f32 %v1800, %v1804
    %vm1807 = vcmp.gt.f32.partialorder %v1805, 0.0
    %vm1808 = vcmp.gt.f32.partialorder %v1806, 0.0
    %v1809 = vmul.f32 %v1805, 0.01
    %v1810 = vmul.f32 %v1806, 0.01
    %v1811 = vsel %vm1807, %v1805, %v1809
    %v1812 = vsel %vm1808, %v1806, %v1810
    %v1813 = vadd.f32 %v1811, %v63
    %v1814 = vadd.f32 %v1812, %v64
    %v1815 = vsel %vm77, %v1813, -inf
    %1816 = vmax.xlane.f32.xlu0 %v1815
    %v1817 = vpop.xlane.xlu0 %1816
    %v1818 = vsel %vm77, %v1814, -inf
    %1819 = vmax.xlane.f32.xlu0 %v1818
    %v1820 = vpop.xlane.xlu0 %1819
    %v1821 = vsub.f32 %v1813, %v1817
    %v1822 = vsub.f32 %v1814, %v1820
    %v1823 = vmul.f32 %v1821, 1.442695
    %v1824 = vpow.pop %v1823
    %v1825 = vmul.f32 %v1822, 1.442695
    %v1826 = vpow.pop %v1825
    %v1827 = vsel %vm77, %v1824, 0.0
    %1828 = vadd.xlane.f32.xlu0 %v1827
    %v1829 = vpop.xlane.xlu0 %1828
    %v1830 = vsel %vm77, %v1826, 0.0
    %1831 = vadd.xlane.f32.xlu0 %v1830
    %v1832 = vpop.xlane.xlu0 %1831
    %v1833 = vrcp.pop %v1829
    %v1834 = vrcp.pop %v1832
    %v1835 = vmul.f32 %v1829, %v1833
    %v1836 = vmul.f32 %v1832, %v1834
    %v1837 = vsub.f32 2.0, %v1835
    %v1838 = vsub.f32 2.0, %v1836
    %v1839 = vmul.f32 %v1833, %v1837
    %v1840 = vmul.f32 %v1834, %v1838
    %v1841 = vmul.f32 %v1824, %v1839
    %v1842 = vmul.f32 %v1826, %v1840
    %v1844 = vsel %vm77, %v1841, 0
    %v1847 = vsel %vm77, %v1842, 0
    %1849 = vmatprep.subr.mxu0 0.0
    %1850 = vmatpush1.msra.mxu0 %v1713
    %1851 = vmatprep.subr.mxu0 0.0
    %1852 = vmatpush1.msra.mxu0 %v1718
    %1853 = vmatprep.subr.mxu0 0.0
    %1854 = vmatpush1.msra.mxu0 0.0
    %1855 = vmatprep.subr.mxu0 0.0
    %1856 = vmatpush1.msra.mxu0 0.0
    %1857 = vmatprep.subr.mxu0 0.0
    %1858 = vmatpush1.msra.mxu0 0.0
    %1859 = vmatprep.subr.mxu0 0.0
    %1860 = vmatpush1.msra.mxu0 0.0
    %1861 = vmatprep.subr.mxu0 0.0
    %1862 = vmatpush1.msra.mxu0 0.0
    %1863 = vmatprep.subr.mxu0 0.0
    %1864 = vmatpush1.msra.mxu0 0.0
    %1865 = vmatprep.subr.mxu0 0.0
    %1866 = vmatpush1.msra.mxu0 0.0
    %1867 = vmatprep.subr.mxu0 0.0
    %1868 = vmatpush1.msra.mxu0 0.0
    %1869 = vmatprep.subr.mxu0 0.0
    %1870 = vmatpush1.msra.mxu0 0.0
    %1871 = vmatprep.subr.mxu0 0.0
    %1872 = vmatpush1.msra.mxu0 0.0
    %1873 = vmatprep.subr.mxu0 0.0
    %1874 = vmatpush1.msra.mxu0 0.0
    %1875 = vmatprep.subr.mxu0 0.0
    %1876 = vmatpush1.msra.mxu0 0.0
    %1877 = vmatprep.subr.mxu0 0.0
    %1878 = vmatpush1.msra.mxu0 0.0
    %1879 = vmatprep.subr.mxu0 0.0
    %1880 = vmatpush1.msra.mxu0 0.0
    %1881 = vmatprep.subr.mxu0 0.0
    %1882 = vmatpush1.msra.mxu0 0.0
    %1883 = vmatprep.subr.mxu0 0.0
    %1884 = vmatpush1.msra.mxu0 0.0
    %1885 = vmatprep.subr.mxu0 0.0
    %1886 = vmatpush1.msra.mxu0 0.0
    %1887 = vmatprep.subr.mxu0 0.0
    %1888 = vmatpush1.msra.mxu0 0.0
    %1889 = vmatprep.subr.mxu0 0.0
    %1890 = vmatpush1.msra.mxu0 0.0
    %1891 = vmatprep.subr.mxu0 0.0
    %1892 = vmatpush1.msra.mxu0 0.0
    %1893 = vmatprep.subr.mxu0 0.0
    %1894 = vmatpush1.msra.mxu0 0.0
    %1895 = vmatprep.subr.mxu0 0.0
    %1896 = vmatpush1.msra.mxu0 0.0
    %1897 = vmatprep.subr.mxu0 0.0
    %1898 = vmatpush1.msra.mxu0 0.0
    %1899 = vmatprep.subr.mxu0 0.0
    %1900 = vmatpush1.msra.mxu0 0.0
    %1901 = vmatprep.subr.mxu0 0.0
    %1902 = vmatpush1.msra.mxu0 0.0
    %1903 = vmatprep.subr.mxu0 0.0
    %1904 = vmatpush1.msra.mxu0 0.0
    %1905 = vmatprep.subr.mxu0 0.0
    %1906 = vmatpush1.msra.mxu0 0.0
    %1907 = vmatprep.subr.mxu0 0.0
    %1908 = vmatpush1.msra.mxu0 0.0
    %1909 = vmatprep.subr.mxu0 0.0
    %1910 = vmatpush1.msra.mxu0 0.0
    %1911 = vmatprep.subr.mxu0 0.0
    %1912 = vmatpush1.msra.mxu0 0.0
    %1913 = vmatprep.mubr.f32.mxu0 0.0
    %1914 = vmatmul.mubr.f32.gmra.mrb[0].mxu0 %v1844
    %v1915 = vpop.f32.mrb[0].mxu0
    %v1916 = vadd.f32 0.0, %v1915
    %v1917 = vpop.f32.mrb[0].mxu0
    %1918 = vmatprep.mubr.f32.mxu0 0.0
    %1919 = vmatmul.mubr.f32.gmra.mrb[0].mxu0 %v1847
    %v1920 = vpop.f32.mrb[0].mxu0
    %v1921 = vadd.f32 0.0, %v1920
    %v1922 = vpop.f32.mrb[0].mxu0
    %1923 = vdwg.mxu0
    %1924 = vst [vmem:[%s3] sm:$0xff] %v1916
    %1925 = vst [vmem:[%s3 + $0x8] sm:$0xff] %v1921
    // Predicated region
    $region26: #{forward.1} parent=1 // pred_check
      _
    $region27: #{forward.1} parent=1 // pred_check_branch
      %1927 = sbr.rel (0) target = $region29
    $region28: #{forward.1} parent=1 // pred_region
      _
    $region29: #{forward.1} parent=1 // pred_fallthru
      _
    // Predicated region
    $region30: #{forward.1} parent=1 // pred_check
      _
    $region31: #{forward.1} parent=1 // pred_check_branch
      %1929 = sbr.rel (0) target = $region33
    $region32: #{forward.1} parent=1 // pred_region
      _
    $region33: #{forward.1} parent=1 // pred_fallthru
      _
    %1930 = vsyncpa [#allocation3], 1
    %1931 = vsyncpa [#allocation5], 1

</llo_original>
